<compile_context>
chip_gen: v5e
topology: v5e:2x2
jax: 0.10.0
libtpu: 0.0.40
codegen_flags: <defaults>
</compile_context>

<pallas_src>
import math
import functools

import jax
import jax.numpy as jnp
from jax.experimental import pallas as pl
from jax.experimental.pallas import tpu as pltpu  # noqa: F401  (TPU backend; no TPU-specific opts needed at this size)

# ----------------------------- configuration --------------------------------
NODE_FEATURES = 16
HIDDEN = 32
HEADS = 4
HEAD_DIM = HIDDEN // HEADS
NUM_LAYERS = 2
OUTPUT_DIM = 1
N_NODES = 16          # 2 graphs x 8 nodes
N_GRAPHS = 2
LN_EPS = 1e-5


# ------------------------------- fused kernel --------------------------------
def _fused_forward_kernel(
        x_ref, w_emb_ref, b_emb_ref,
        madd_ref, mmul_ref, hsel_ref,
        w_qkvs_ref, b_qkvs_ref, wb_agg_ref, wb_skip_ref, ln_g_ref, ln_b_ref,
        onehot_ref, invcnt_ref, w1_ref, b1_ref, w2_ref, b2_ref,
        o_ref, *, num_layers, heads, hidden, eps):
    """Whole GraphTransformer forward in one kernel body."""
    # ---- node embedding -----------------------------------------------------
    h = (jnp.dot(x_ref[...], w_emb_ref[...], preferred_element_type=jnp.float32)
         + b_emb_ref[...])                                     # (N, D)
    n = h.shape[0]
    d = hidden

    madd = madd_ref[...]    # (H*N, H*N) additive mask: 0 / -1e30 (head-diag AND adjacency)
    mmul = mmul_ref[...]    # (H*N, H*N) multiplicative mask: 0 / 1 (exact zeroing)
    hsel = hsel_ref[...]    # (H*N, D)   head-lane selector 0 / 1 (row h*N+i -> head h lanes)

    # ---- transformer layers (statically unrolled) ---------------------------
    for l in range(num_layers):
        # Replicate nodes across heads on the sublane axis: row h*N + i == node i.
        h_rep = jnp.concatenate([h] * heads, axis=0)           # (H*N, D)

        # Fused lane-dense Q/K/V/skip projection (32 x 128 weight); the
        # 1/sqrt(head_dim) scale is pre-folded into the Q columns at init.
        proj = (jnp.dot(h_rep, w_qkvs_ref[l],
                        preferred_element_type=jnp.float32)
                + b_qkvs_ref[l])                               # (H*N, 4D)
        q = proj[:, 0 * d:1 * d] * hsel                        # head-masked queries
        k = proj[:, 1 * d:2 * d]                               # full keys (head picked by Q mask)
        v = proj[:, 2 * d:3 * d]                               # full values
        x_r = proj[0:n, 3 * d:4 * d]                           # skip projection, (N, D)

        # All heads in ONE score matmul: scores[h*N+i, h'*N+j] = q_h[i] . k_h[j];
        # cross-head / non-edge entries are killed by the block-diagonal masks.
        scores = jax.lax.dot_general(
            q, k, (((1,), (1,)), ((), ())),
            preferred_element_type=jnp.float32)                # (H*N, H*N)
        scores = scores + madd
        mx = jnp.max(scores, axis=-1, keepdims=True)
        e = jnp.exp(scores - mx) * mmul                        # exact zeros off-mask
        denom = jnp.sum(e, axis=-1, keepdims=True)
        alpha = e / jnp.maximum(denom, 1e-30)                  # exact divide; no-in-edge rows -> 0

        # One aggregation matmul for all heads.
        out_s = jnp.dot(alpha, v, preferred_element_type=jnp.float32)  # (H*N, D)

        # Select each head's lane block and fold head blocks back to (N, D)
        # via sublane slices + adds (no lane concatenate, no reshape).
        out_m = out_s * hsel
        agg = out_m[0:n]
        for hh in range(1, heads):
            agg = agg + out_m[hh * n:(hh + 1) * n]             # (N, D) = concat of heads

        # beta gate: sigmoid(lin_beta([agg, x_r, agg - x_r])) algebraically
        # folded to two (1, D) vectors; evaluated as elementwise-mul + lane reduce.
        s = jnp.sum(agg * wb_agg_ref[l] + x_r * wb_skip_ref[l],
                    axis=-1, keepdims=True)                    # (N, 1)
        beta = jax.nn.sigmoid(s)
        x_new = beta * x_r + (1.0 - beta) * agg

        # residual + LayerNorm (dropout is identity at inference)
        xr = h + x_new
        mu = jnp.mean(xr, axis=-1, keepdims=True)
        var = jnp.mean((xr - mu) ** 2, axis=-1, keepdims=True)
        h = (xr - mu) * jax.lax.rsqrt(var + eps) * ln_g_ref[l] + ln_b_ref[l]

    # ---- global mean pool + classifier --------------------------------------
    pooled = (jnp.dot(onehot_ref[...], h, preferred_element_type=jnp.float32)
              * invcnt_ref[...])                               # (G, D)
    z = jnp.maximum(
        jnp.dot(pooled, w1_ref[...], preferred_element_type=jnp.float32)
        + b1_ref[...], 0.0)
    # Final (G, 1) store is tiny; lane-padding not worth it at this size.
    o_ref[...] = (jnp.dot(z, w2_ref[...], preferred_element_type=jnp.float32)
                  + b2_ref[...])


# ------------------------------ parameters ------------------------------------
def init_params(key):
    keys = iter(jax.random.split(key, 32))

    def lin_t(din, dout):
        # pre-transposed (in, out) weight + (1, out) bias (torch Linear semantics)
        w = jax.random.normal(next(keys), (din, dout), jnp.float32) / math.sqrt(din)
        b = 0.01 * jax.random.normal(next(keys), (1, dout), jnp.float32)
        return w, b

    w_emb, b_emb = lin_t(NODE_FEATURES, HIDDEN)

    d = HEADS * HEAD_DIM  # == HIDDEN
    scale = 1.0 / math.sqrt(HEAD_DIM)
    w_qkvs_l, b_qkvs_l = [], []
    wb_agg_l, wb_skip_l = [], []
    ln_g_l, ln_b_l = [], []
    for _ in range(NUM_LAYERS):
        wq, bq = lin_t(HIDDEN, d)
        wk, bk = lin_t(HIDDEN, d)
        wv, bv = lin_t(HIDDEN, d)
        ws, bs = lin_t(HIDDEN, d)
        # fold 1/sqrt(head_dim) attention scale into the Q projection (exact)
        wq, bq = wq * scale, bq * scale
        # fused lane-dense projection weights: (HIDDEN, 4*HIDDEN) = (32, 128)
        w_qkvs_l.append(jnp.concatenate([wq, wk, wv, ws], axis=1))
        b_qkvs_l.append(jnp.concatenate([bq, bk, bv, bs], axis=1))
        # lin_beta (3D -> 1, no bias); folded: s = agg@(w1+w3) + x_r@(w2-w3)
        beta_raw = (jax.random.normal(next(keys), (3 * d, 1), jnp.float32)
                    / math.sqrt(3 * d))
        w1, w2, w3 = beta_raw[0:d], beta_raw[d:2 * d], beta_raw[2 * d:3 * d]
        wb_agg_l.append((w1 + w3).T)     # (1, D)
        wb_skip_l.append((w2 - w3).T)    # (1, D)
        ln_g_l.append(jnp.ones((1, HIDDEN), jnp.float32))
        ln_b_l.append(jnp.zeros((1, HIDDEN), jnp.float32))

    w_cls1, b_cls1 = lin_t(HIDDEN, HIDDEN // 2)
    w_cls2, b_cls2 = lin_t(HIDDEN // 2, OUTPUT_DIM)

    return {
        "w_emb": w_emb, "b_emb": b_emb,
        "w_qkvs": jnp.stack(w_qkvs_l),    # (L, 32, 128)
        "b_qkvs": jnp.stack(b_qkvs_l),    # (L, 1, 128)
        "wb_agg": jnp.stack(wb_agg_l),    # (L, 1, 32)
        "wb_skip": jnp.stack(wb_skip_l),  # (L, 1, 32)
        "ln_g": jnp.stack(ln_g_l),        # (L, 1, 32)
        "ln_b": jnp.stack(ln_b_l),        # (L, 1, 32)
        "w_cls1": w_cls1, "b_cls1": b_cls1,
        "w_cls2": w_cls2, "b_cls2": b_cls2,
    }


# ------------------------------- forward --------------------------------------
def graph_transformer_forward(params, x, madd_big, mmul_big, headsel,
                              batch_onehot, inv_counts):
    g = batch_onehot.shape[0]
    kern = functools.partial(
        _fused_forward_kernel,
        num_layers=NUM_LAYERS, heads=HEADS, hidden=HIDDEN, eps=LN_EPS)
    # Single pallas_call, no grid: whole arrays become single VMEM blocks,
    # one kernel invocation, no pipelining scaffolding.
    return pl.pallas_call(
        kern,
        out_shape=jax.ShapeDtypeStruct((g, OUTPUT_DIM), jnp.float32),
    )(x, params["w_emb"], params["b_emb"],
      madd_big, mmul_big, headsel,
      params["w_qkvs"], params["b_qkvs"],
      params["wb_agg"], params["wb_skip"],
      params["ln_g"], params["ln_b"],
      batch_onehot, inv_counts,
      params["w_cls1"], params["b_cls1"],
      params["w_cls2"], params["b_cls2"])


graph_transformer_forward_jit = jax.jit(graph_transformer_forward)


# --------------------------------- main ---------------------------------------
if __name__ == "__main__":
    key = jax.random.PRNGKey(0)
    k_param, k_x = jax.random.split(key)

    params = init_params(k_param)

    # node features
    x = jax.random.normal(k_x, (N_NODES, NODE_FEATURES), jnp.float32)

    # batch assignment: 2 graphs of 8 nodes each
    nodes_per_graph = N_NODES // N_GRAPHS
    batch = jnp.repeat(jnp.arange(N_GRAPHS, dtype=jnp.int32), nodes_per_graph)
    batch_onehot = (batch[None, :] == jnp.arange(N_GRAPHS)[:, None]).astype(jnp.float32)
    counts = jnp.sum(batch_onehot, axis=1, keepdims=True)        # (G, 1)
    inv_counts = 1.0 / counts

    # edge_index: directed ring (both directions) within each graph -> (2, 32)
    src_list, dst_list = [], []
    for g in range(N_GRAPHS):
        base = g * nodes_per_graph
        for i in range(nodes_per_graph):
            a = base + i
            b = base + (i + 1) % nodes_per_graph
            src_list += [a, b]
            dst_list += [b, a]
    edge_index = jnp.array([src_list, dst_list], dtype=jnp.int32)

    # dense adjacency mask: mask[dst, src] = 1  (messages flow source -> target)
    mask_mul = jnp.zeros((N_NODES, N_NODES), jnp.float32)
    mask_mul = mask_mul.at[edge_index[1], edge_index[0]].set(1.0)

    # Head-stacked attention masks (row/col order = h*N + i, head-major),
    # precomputed once and DMA'd once into the fused kernel:
    #   mmul_big: 1 iff same head AND edge src->dst; madd_big: 0 / -1e30.
    mmul_big = jnp.kron(jnp.eye(HEADS, dtype=jnp.float32), mask_mul)       # (H*N, H*N)
    madd_big = jnp.where(mmul_big > 0, 0.0, -1e30).astype(jnp.float32)
    # head-lane selector: row h*N+i has ones on lanes [h*HEAD_DIM, (h+1)*HEAD_DIM)
    headsel = jnp.kron(jnp.eye(HEADS, dtype=jnp.float32),
                       jnp.ones((N_NODES, HEAD_DIM), jnp.float32))         # (H*N, HIDDEN)

    out = graph_transformer_forward_jit(
        params, x, madd_big, mmul_big, headsel, batch_onehot, inv_counts)
    out = jax.block_until_ready(out)
    assert out.shape == (N_GRAPHS, OUTPUT_DIM)
    assert bool(jnp.all(jnp.isfinite(out)))
    print("KERNEL_OK")
</pallas_src>

<mosaic_0001>
module attributes {stable_mosaic.version = 11 : i64} {
  func.func @_fused_forward_kernel(%arg0: memref<16x16xf32, #tpu.memory_space<vmem>>, %arg1: memref<16x32xf32, #tpu.memory_space<vmem>>, %arg2: memref<1x32xf32, #tpu.memory_space<vmem>>, %arg3: memref<64x64xf32, #tpu.memory_space<vmem>>, %arg4: memref<64x64xf32, #tpu.memory_space<vmem>>, %arg5: memref<64x32xf32, #tpu.memory_space<vmem>>, %arg6: memref<2x32x128xf32, #tpu.memory_space<vmem>>, %arg7: memref<2x1x128xf32, #tpu.memory_space<vmem>>, %arg8: memref<2x1x32xf32, #tpu.memory_space<vmem>>, %arg9: memref<2x1x32xf32, #tpu.memory_space<vmem>>, %arg10: memref<2x1x32xf32, #tpu.memory_space<vmem>>, %arg11: memref<2x1x32xf32, #tpu.memory_space<vmem>>, %arg12: memref<2x16xf32, #tpu.memory_space<vmem>>, %arg13: memref<2x1xf32, #tpu.memory_space<vmem>>, %arg14: memref<32x16xf32, #tpu.memory_space<vmem>>, %arg15: memref<1x16xf32, #tpu.memory_space<vmem>>, %arg16: memref<16x1xf32, #tpu.memory_space<vmem>>, %arg17: memref<1x1xf32, #tpu.memory_space<vmem>>, %arg18: memref<2x1xf32, #tpu.memory_space<vmem>>) attributes {dimension_semantics = [], scalar_prefetch = 0 : i64, scratch_operands = 0 : i64, tpu.core_type = #tpu.core_type<tc>} {
    %c0 = arith.constant 0 : index
    %c0_0 = arith.constant 0 : index
    %0 = vector.load %arg0[%c0, %c0_0] : memref<16x16xf32, #tpu.memory_space<vmem>>, vector<16x16xf32>
    %c0_1 = arith.constant 0 : index
    %c0_2 = arith.constant 0 : index
    %1 = vector.load %arg1[%c0_1, %c0_2] : memref<16x32xf32, #tpu.memory_space<vmem>>, vector<16x32xf32>
    %cst = arith.constant dense<0.000000e+00> : vector<16x32xf32>
    %2 = tpu.matmul %0, %1, %cst {dimension_numbers = #tpu.dot_dimension_numbers<[1], [0], [0], [1], [0, 0, 1, 1], [], []>} : vector<16x16xf32>, vector<16x32xf32>, vector<16x32xf32> -> vector<16x32xf32>
    %c0_3 = arith.constant 0 : index
    %c0_4 = arith.constant 0 : index
    %3 = vector.load %arg2[%c0_3, %c0_4] : memref<1x32xf32, #tpu.memory_space<vmem>>, vector<1x32xf32>
    %4 = vector.broadcast %3 : vector<1x32xf32> to vector<16x32xf32>
    %5 = arith.addf %2, %4 : vector<16x32xf32>
    %c0_5 = arith.constant 0 : index
    %c0_6 = arith.constant 0 : index
    %6 = vector.load %arg3[%c0_5, %c0_6] : memref<64x64xf32, #tpu.memory_space<vmem>>, vector<64x64xf32>
    %c0_7 = arith.constant 0 : index
    %c0_8 = arith.constant 0 : index
    %7 = vector.load %arg4[%c0_7, %c0_8] : memref<64x64xf32, #tpu.memory_space<vmem>>, vector<64x64xf32>
    %c0_9 = arith.constant 0 : index
    %c0_10 = arith.constant 0 : index
    %8 = vector.load %arg5[%c0_9, %c0_10] : memref<64x32xf32, #tpu.memory_space<vmem>>, vector<64x32xf32>
    %9 = tpu.concatenate %5, %5, %5, %5 in 0 : vector<16x32xf32>, vector<16x32xf32>, vector<16x32xf32>, vector<16x32xf32> -> vector<64x32xf32>
    %c0_11 = arith.constant 0 : index
    %c0_12 = arith.constant 0 : index
    %c0_13 = arith.constant 0 : index
    %10 = vector.load %arg6[%c0_11, %c0_12, %c0_13] : memref<2x32x128xf32, #tpu.memory_space<vmem>>, vector<1x32x128xf32>
    %11 = vector.shape_cast %10 : vector<1x32x128xf32> to vector<32x128xf32>
    %cst_14 = arith.constant dense<0.000000e+00> : vector<64x128xf32>
    %12 = tpu.matmul %9, %11, %cst_14 {dimension_numbers = #tpu.dot_dimension_numbers<[1], [0], [0], [1], [0, 0, 1, 1], [], []>} : vector<64x32xf32>, vector<32x128xf32>, vector<64x128xf32> -> vector<64x128xf32>
    %c0_15 = arith.constant 0 : index
    %c0_16 = arith.constant 0 : index
    %c0_17 = arith.constant 0 : index
    %13 = vector.load %arg7[%c0_15, %c0_16, %c0_17] : memref<2x1x128xf32, #tpu.memory_space<vmem>>, vector<1x1x128xf32>
    %14 = vector.shape_cast %13 : vector<1x1x128xf32> to vector<1x128xf32>
    %15 = vector.broadcast %14 : vector<1x128xf32> to vector<64x128xf32>
    %16 = arith.addf %12, %15 : vector<64x128xf32>
    %17 = vector.extract_strided_slice %16 {offsets = [0, 0], sizes = [64, 32], strides = [1, 1]} : vector<64x128xf32> to vector<64x32xf32>
    %18 = arith.mulf %17, %8 : vector<64x32xf32>
    %19 = vector.extract_strided_slice %16 {offsets = [0, 32], sizes = [64, 32], strides = [1, 1]} : vector<64x128xf32> to vector<64x32xf32>
    %20 = vector.extract_strided_slice %16 {offsets = [0, 64], sizes = [64, 32], strides = [1, 1]} : vector<64x128xf32> to vector<64x32xf32>
    %21 = vector.extract_strided_slice %16 {offsets = [0, 96], sizes = [16, 32], strides = [1, 1]} : vector<64x128xf32> to vector<16x32xf32>
    %cst_18 = arith.constant dense<0.000000e+00> : vector<64x64xf32>
    %22 = tpu.matmul %18, %19, %cst_18 {dimension_numbers = #tpu.dot_dimension_numbers<[1], [1], [0], [0], [0, 0, 1, 0], [], []>} : vector<64x32xf32>, vector<64x32xf32>, vector<64x64xf32> -> vector<64x64xf32>
    %23 = arith.addf %22, %6 : vector<64x64xf32>
    %cst_19 = arith.constant dense<0xFF800000> : vector<64xf32>
    %24 = vector.multi_reduction <maximumf>, %23, %cst_19 [1] : vector<64x64xf32> to vector<64xf32>
    %25 = vector.shape_cast %24 : vector<64xf32> to vector<64x1xf32>
    %26 = vector.broadcast %25 : vector<64x1xf32> to vector<64x64xf32>
    %27 = arith.subf %23, %26 : vector<64x64xf32>
    %28 = math.exp %27 : vector<64x64xf32>
    %29 = arith.mulf %28, %7 : vector<64x64xf32>
    %cst_20 = arith.constant dense<0.000000e+00> : vector<64xf32>
    %30 = vector.multi_reduction <add>, %29, %cst_20 [1] : vector<64x64xf32> to vector<64xf32>
    %31 = vector.shape_cast %30 : vector<64xf32> to vector<64x1xf32>
    %cst_21 = arith.constant 1.000000e-30 : f32
    %32 = vector.broadcast %cst_21 : f32 to vector<64x1xf32>
    %33 = arith.maximumf %31, %32 : vector<64x1xf32>
    %34 = vector.broadcast %33 : vector<64x1xf32> to vector<64x64xf32>
    %35 = arith.divf %29, %34 : vector<64x64xf32>
    %cst_22 = arith.constant dense<0.000000e+00> : vector<64x32xf32>
    %36 = tpu.matmul %35, %20, %cst_22 {dimension_numbers = #tpu.dot_dimension_numbers<[1], [0], [0], [1], [0, 0, 1, 1], [], []>} : vector<64x64xf32>, vector<64x32xf32>, vector<64x32xf32> -> vector<64x32xf32>
    %37 = arith.mulf %36, %8 : vector<64x32xf32>
    %38 = vector.extract_strided_slice %37 {offsets = [0, 0], sizes = [16, 32], strides = [1, 1]} : vector<64x32xf32> to vector<16x32xf32>
    %39 = vector.extract_strided_slice %37 {offsets = [16, 0], sizes = [16, 32], strides = [1, 1]} : vector<64x32xf32> to vector<16x32xf32>
    %40 = arith.addf %38, %39 : vector<16x32xf32>
    %41 = vector.extract_strided_slice %37 {offsets = [32, 0], sizes = [16, 32], strides = [1, 1]} : vector<64x32xf32> to vector<16x32xf32>
    %42 = arith.addf %40, %41 : vector<16x32xf32>
    %43 = vector.extract_strided_slice %37 {offsets = [48, 0], sizes = [16, 32], strides = [1, 1]} : vector<64x32xf32> to vector<16x32xf32>
    %44 = arith.addf %42, %43 : vector<16x32xf32>
    %c0_23 = arith.constant 0 : index
    %c0_24 = arith.constant 0 : index
    %c0_25 = arith.constant 0 : index
    %45 = vector.load %arg8[%c0_23, %c0_24, %c0_25] : memref<2x1x32xf32, #tpu.memory_space<vmem>>, vector<1x1x32xf32>
    %46 = vector.shape_cast %45 : vector<1x1x32xf32> to vector<1x32xf32>
    %47 = vector.broadcast %46 : vector<1x32xf32> to vector<16x32xf32>
    %48 = arith.mulf %44, %47 : vector<16x32xf32>
    %c0_26 = arith.constant 0 : index
    %c0_27 = arith.constant 0 : index
    %c0_28 = arith.constant 0 : index
    %49 = vector.load %arg9[%c0_26, %c0_27, %c0_28] : memref<2x1x32xf32, #tpu.memory_space<vmem>>, vector<1x1x32xf32>
    %50 = vector.shape_cast %49 : vector<1x1x32xf32> to vector<1x32xf32>
    %51 = vector.broadcast %50 : vector<1x32xf32> to vector<16x32xf32>
    %52 = arith.mulf %21, %51 : vector<16x32xf32>
    %53 = arith.addf %48, %52 : vector<16x32xf32>
    %cst_29 = arith.constant dense<0.000000e+00> : vector<16xf32>
    %54 = vector.multi_reduction <add>, %53, %cst_29 [1] : vector<16x32xf32> to vector<16xf32>
    %55 = vector.shape_cast %54 : vector<16xf32> to vector<16x1xf32>
    %56 = arith.negf %55 : vector<16x1xf32>
    %57 = math.exp %56 : vector<16x1xf32>
    %cst_30 = arith.constant 1.000000e+00 : f32
    %58 = vector.broadcast %cst_30 : f32 to vector<16x1xf32>
    %59 = arith.addf %58, %57 : vector<16x1xf32>
    %60 = arith.divf %58, %59 : vector<16x1xf32>
    %61 = vector.broadcast %60 : vector<16x1xf32> to vector<16x32xf32>
    %62 = arith.mulf %61, %21 : vector<16x32xf32>
    %cst_31 = arith.constant 1.000000e+00 : f32
    %63 = vector.broadcast %cst_31 : f32 to vector<16x1xf32>
    %64 = arith.subf %63, %60 : vector<16x1xf32>
    %65 = vector.broadcast %64 : vector<16x1xf32> to vector<16x32xf32>
    %66 = arith.mulf %65, %44 : vector<16x32xf32>
    %67 = arith.addf %62, %66 : vector<16x32xf32>
    %68 = arith.addf %5, %67 : vector<16x32xf32>
    %cst_32 = arith.constant dense<0.000000e+00> : vector<16xf32>
    %69 = vector.multi_reduction <add>, %68, %cst_32 [1] : vector<16x32xf32> to vector<16xf32>
    %70 = vector.shape_cast %69 : vector<16xf32> to vector<16x1xf32>
    %cst_33 = arith.constant 3.200000e+01 : f32
    %71 = vector.broadcast %cst_33 : f32 to vector<16x1xf32>
    %72 = arith.divf %70, %71 : vector<16x1xf32>
    %73 = vector.broadcast %72 : vector<16x1xf32> to vector<16x32xf32>
    %74 = arith.subf %68, %73 : vector<16x32xf32>
    %75 = arith.mulf %74, %74 : vector<16x32xf32>
    %cst_34 = arith.constant dense<0.000000e+00> : vector<16xf32>
    %76 = vector.multi_reduction <add>, %75, %cst_34 [1] : vector<16x32xf32> to vector<16xf32>
    %77 = vector.shape_cast %76 : vector<16xf32> to vector<16x1xf32>
    %cst_35 = arith.constant 3.200000e+01 : f32
    %78 = vector.broadcast %cst_35 : f32 to vector<16x1xf32>
    %79 = arith.divf %77, %78 : vector<16x1xf32>
    %80 = vector.broadcast %72 : vector<16x1xf32> to vector<16x32xf32>
    %81 = arith.subf %68, %80 : vector<16x32xf32>
    %cst_36 = arith.constant 9.99999974E-6 : f32
    %82 = vector.broadcast %cst_36 : f32 to vector<16x1xf32>
    %83 = arith.addf %79, %82 : vector<16x1xf32>
    %84 = math.rsqrt %83 : vector<16x1xf32>
    %85 = vector.broadcast %84 : vector<16x1xf32> to vector<16x32xf32>
    %86 = arith.mulf %81, %85 : vector<16x32xf32>
    %c0_37 = arith.constant 0 : index
    %c0_38 = arith.constant 0 : index
    %c0_39 = arith.constant 0 : index
    %87 = vector.load %arg10[%c0_37, %c0_38, %c0_39] : memref<2x1x32xf32, #tpu.memory_space<vmem>>, vector<1x1x32xf32>
    %88 = vector.shape_cast %87 : vector<1x1x32xf32> to vector<1x32xf32>
    %89 = vector.broadcast %88 : vector<1x32xf32> to vector<16x32xf32>
    %90 = arith.mulf %86, %89 : vector<16x32xf32>
    %c0_40 = arith.constant 0 : index
    %c0_41 = arith.constant 0 : index
    %c0_42 = arith.constant 0 : index
    %91 = vector.load %arg11[%c0_40, %c0_41, %c0_42] : memref<2x1x32xf32, #tpu.memory_space<vmem>>, vector<1x1x32xf32>
    %92 = vector.shape_cast %91 : vector<1x1x32xf32> to vector<1x32xf32>
    %93 = vector.broadcast %92 : vector<1x32xf32> to vector<16x32xf32>
    %94 = arith.addf %90, %93 : vector<16x32xf32>
    %95 = tpu.concatenate %94, %94, %94, %94 in 0 : vector<16x32xf32>, vector<16x32xf32>, vector<16x32xf32>, vector<16x32xf32> -> vector<64x32xf32>
    %c1 = arith.constant 1 : index
    %c0_43 = arith.constant 0 : index
    %c0_44 = arith.constant 0 : index
    %96 = vector.load %arg6[%c1, %c0_43, %c0_44] : memref<2x32x128xf32, #tpu.memory_space<vmem>>, vector<1x32x128xf32>
    %97 = vector.shape_cast %96 : vector<1x32x128xf32> to vector<32x128xf32>
    %cst_45 = arith.constant dense<0.000000e+00> : vector<64x128xf32>
    %98 = tpu.matmul %95, %97, %cst_45 {dimension_numbers = #tpu.dot_dimension_numbers<[1], [0], [0], [1], [0, 0, 1, 1], [], []>} : vector<64x32xf32>, vector<32x128xf32>, vector<64x128xf32> -> vector<64x128xf32>
    %c1_46 = arith.constant 1 : index
    %c0_47 = arith.constant 0 : index
    %c0_48 = arith.constant 0 : index
    %99 = vector.load %arg7[%c1_46, %c0_47, %c0_48] : memref<2x1x128xf32, #tpu.memory_space<vmem>>, vector<1x1x128xf32>
    %100 = vector.shape_cast %99 : vector<1x1x128xf32> to vector<1x128xf32>
    %101 = vector.broadcast %100 : vector<1x128xf32> to vector<64x128xf32>
    %102 = arith.addf %98, %101 : vector<64x128xf32>
    %103 = vector.extract_strided_slice %102 {offsets = [0, 0], sizes = [64, 32], strides = [1, 1]} : vector<64x128xf32> to vector<64x32xf32>
    %104 = arith.mulf %103, %8 : vector<64x32xf32>
    %105 = vector.extract_strided_slice %102 {offsets = [0, 32], sizes = [64, 32], strides = [1, 1]} : vector<64x128xf32> to vector<64x32xf32>
    %106 = vector.extract_strided_slice %102 {offsets = [0, 64], sizes = [64, 32], strides = [1, 1]} : vector<64x128xf32> to vector<64x32xf32>
    %107 = vector.extract_strided_slice %102 {offsets = [0, 96], sizes = [16, 32], strides = [1, 1]} : vector<64x128xf32> to vector<16x32xf32>
    %cst_49 = arith.constant dense<0.000000e+00> : vector<64x64xf32>
    %108 = tpu.matmul %104, %105, %cst_49 {dimension_numbers = #tpu.dot_dimension_numbers<[1], [1], [0], [0], [0, 0, 1, 0], [], []>} : vector<64x32xf32>, vector<64x32xf32>, vector<64x64xf32> -> vector<64x64xf32>
    %109 = arith.addf %108, %6 : vector<64x64xf32>
    %cst_50 = arith.constant dense<0xFF800000> : vector<64xf32>
    %110 = vector.multi_reduction <maximumf>, %109, %cst_50 [1] : vector<64x64xf32> to vector<64xf32>
    %111 = vector.shape_cast %110 : vector<64xf32> to vector<64x1xf32>
    %112 = vector.broadcast %111 : vector<64x1xf32> to vector<64x64xf32>
    %113 = arith.subf %109, %112 : vector<64x64xf32>
    %114 = math.exp %113 : vector<64x64xf32>
    %115 = arith.mulf %114, %7 : vector<64x64xf32>
    %cst_51 = arith.constant dense<0.000000e+00> : vector<64xf32>
    %116 = vector.multi_reduction <add>, %115, %cst_51 [1] : vector<64x64xf32> to vector<64xf32>
    %117 = vector.shape_cast %116 : vector<64xf32> to vector<64x1xf32>
    %cst_52 = arith.constant 1.000000e-30 : f32
    %118 = vector.broadcast %cst_52 : f32 to vector<64x1xf32>
    %119 = arith.maximumf %117, %118 : vector<64x1xf32>
    %120 = vector.broadcast %119 : vector<64x1xf32> to vector<64x64xf32>
    %121 = arith.divf %115, %120 : vector<64x64xf32>
    %cst_53 = arith.constant dense<0.000000e+00> : vector<64x32xf32>
    %122 = tpu.matmul %121, %106, %cst_53 {dimension_numbers = #tpu.dot_dimension_numbers<[1], [0], [0], [1], [0, 0, 1, 1], [], []>} : vector<64x64xf32>, vector<64x32xf32>, vector<64x32xf32> -> vector<64x32xf32>
    %123 = arith.mulf %122, %8 : vector<64x32xf32>
    %124 = vector.extract_strided_slice %123 {offsets = [0, 0], sizes = [16, 32], strides = [1, 1]} : vector<64x32xf32> to vector<16x32xf32>
    %125 = vector.extract_strided_slice %123 {offsets = [16, 0], sizes = [16, 32], strides = [1, 1]} : vector<64x32xf32> to vector<16x32xf32>
    %126 = arith.addf %124, %125 : vector<16x32xf32>
    %127 = vector.extract_strided_slice %123 {offsets = [32, 0], sizes = [16, 32], strides = [1, 1]} : vector<64x32xf32> to vector<16x32xf32>
    %128 = arith.addf %126, %127 : vector<16x32xf32>
    %129 = vector.extract_strided_slice %123 {offsets = [48, 0], sizes = [16, 32], strides = [1, 1]} : vector<64x32xf32> to vector<16x32xf32>
    %130 = arith.addf %128, %129 : vector<16x32xf32>
    %c1_54 = arith.constant 1 : index
    %c0_55 = arith.constant 0 : index
    %c0_56 = arith.constant 0 : index
    %131 = vector.load %arg8[%c1_54, %c0_55, %c0_56] : memref<2x1x32xf32, #tpu.memory_space<vmem>>, vector<1x1x32xf32>
    %132 = vector.shape_cast %131 : vector<1x1x32xf32> to vector<1x32xf32>
    %133 = vector.broadcast %132 : vector<1x32xf32> to vector<16x32xf32>
    %134 = arith.mulf %130, %133 : vector<16x32xf32>
    %c1_57 = arith.constant 1 : index
    %c0_58 = arith.constant 0 : index
    %c0_59 = arith.constant 0 : index
    %135 = vector.load %arg9[%c1_57, %c0_58, %c0_59] : memref<2x1x32xf32, #tpu.memory_space<vmem>>, vector<1x1x32xf32>
    %136 = vector.shape_cast %135 : vector<1x1x32xf32> to vector<1x32xf32>
    %137 = vector.broadcast %136 : vector<1x32xf32> to vector<16x32xf32>
    %138 = arith.mulf %107, %137 : vector<16x32xf32>
    %139 = arith.addf %134, %138 : vector<16x32xf32>
    %cst_60 = arith.constant dense<0.000000e+00> : vector<16xf32>
    %140 = vector.multi_reduction <add>, %139, %cst_60 [1] : vector<16x32xf32> to vector<16xf32>
    %141 = vector.shape_cast %140 : vector<16xf32> to vector<16x1xf32>
    %142 = arith.negf %141 : vector<16x1xf32>
    %143 = math.exp %142 : vector<16x1xf32>
    %cst_61 = arith.constant 1.000000e+00 : f32
    %144 = vector.broadcast %cst_61 : f32 to vector<16x1xf32>
    %145 = arith.addf %144, %143 : vector<16x1xf32>
    %146 = arith.divf %144, %145 : vector<16x1xf32>
    %147 = vector.broadcast %146 : vector<16x1xf32> to vector<16x32xf32>
    %148 = arith.mulf %147, %107 : vector<16x32xf32>
    %cst_62 = arith.constant 1.000000e+00 : f32
    %149 = vector.broadcast %cst_62 : f32 to vector<16x1xf32>
    %150 = arith.subf %149, %146 : vector<16x1xf32>
    %151 = vector.broadcast %150 : vector<16x1xf32> to vector<16x32xf32>
    %152 = arith.mulf %151, %130 : vector<16x32xf32>
    %153 = arith.addf %148, %152 : vector<16x32xf32>
    %154 = arith.addf %94, %153 : vector<16x32xf32>
    %cst_63 = arith.constant dense<0.000000e+00> : vector<16xf32>
    %155 = vector.multi_reduction <add>, %154, %cst_63 [1] : vector<16x32xf32> to vector<16xf32>
    %156 = vector.shape_cast %155 : vector<16xf32> to vector<16x1xf32>
    %cst_64 = arith.constant 3.200000e+01 : f32
    %157 = vector.broadcast %cst_64 : f32 to vector<16x1xf32>
    %158 = arith.divf %156, %157 : vector<16x1xf32>
    %159 = vector.broadcast %158 : vector<16x1xf32> to vector<16x32xf32>
    %160 = arith.subf %154, %159 : vector<16x32xf32>
    %161 = arith.mulf %160, %160 : vector<16x32xf32>
    %cst_65 = arith.constant dense<0.000000e+00> : vector<16xf32>
    %162 = vector.multi_reduction <add>, %161, %cst_65 [1] : vector<16x32xf32> to vector<16xf32>
    %163 = vector.shape_cast %162 : vector<16xf32> to vector<16x1xf32>
    %cst_66 = arith.constant 3.200000e+01 : f32
    %164 = vector.broadcast %cst_66 : f32 to vector<16x1xf32>
    %165 = arith.divf %163, %164 : vector<16x1xf32>
    %166 = vector.broadcast %158 : vector<16x1xf32> to vector<16x32xf32>
    %167 = arith.subf %154, %166 : vector<16x32xf32>
    %cst_67 = arith.constant 9.99999974E-6 : f32
    %168 = vector.broadcast %cst_67 : f32 to vector<16x1xf32>
    %169 = arith.addf %165, %168 : vector<16x1xf32>
    %170 = math.rsqrt %169 : vector<16x1xf32>
    %171 = vector.broadcast %170 : vector<16x1xf32> to vector<16x32xf32>
    %172 = arith.mulf %167, %171 : vector<16x32xf32>
    %c1_68 = arith.constant 1 : index
    %c0_69 = arith.constant 0 : index
    %c0_70 = arith.constant 0 : index
    %173 = vector.load %arg10[%c1_68, %c0_69, %c0_70] : memref<2x1x32xf32, #tpu.memory_space<vmem>>, vector<1x1x32xf32>
    %174 = vector.shape_cast %173 : vector<1x1x32xf32> to vector<1x32xf32>
    %175 = vector.broadcast %174 : vector<1x32xf32> to vector<16x32xf32>
    %176 = arith.mulf %172, %175 : vector<16x32xf32>
    %c1_71 = arith.constant 1 : index
    %c0_72 = arith.constant 0 : index
    %c0_73 = arith.constant 0 : index
    %177 = vector.load %arg11[%c1_71, %c0_72, %c0_73] : memref<2x1x32xf32, #tpu.memory_space<vmem>>, vector<1x1x32xf32>
    %178 = vector.shape_cast %177 : vector<1x1x32xf32> to vector<1x32xf32>
    %179 = vector.broadcast %178 : vector<1x32xf32> to vector<16x32xf32>
    %180 = arith.addf %176, %179 : vector<16x32xf32>
    %c0_74 = arith.constant 0 : index
    %c0_75 = arith.constant 0 : index
    %181 = vector.load %arg12[%c0_74, %c0_75] : memref<2x16xf32, #tpu.memory_space<vmem>>, vector<2x16xf32>
    %cst_76 = arith.constant dense<0.000000e+00> : vector<2x32xf32>
    %182 = tpu.matmul %181, %180, %cst_76 {dimension_numbers = #tpu.dot_dimension_numbers<[1], [0], [0], [1], [0, 0, 1, 1], [], []>} : vector<2x16xf32>, vector<16x32xf32>, vector<2x32xf32> -> vector<2x32xf32>
    %c0_77 = arith.constant 0 : index
    %c0_78 = arith.constant 0 : index
    %183 = vector.load %arg13[%c0_77, %c0_78] : memref<2x1xf32, #tpu.memory_space<vmem>>, vector<2x1xf32>
    %184 = vector.broadcast %183 : vector<2x1xf32> to vector<2x32xf32>
    %185 = arith.mulf %182, %184 : vector<2x32xf32>
    %c0_79 = arith.constant 0 : index
    %c0_80 = arith.constant 0 : index
    %186 = vector.load %arg14[%c0_79, %c0_80] : memref<32x16xf32, #tpu.memory_space<vmem>>, vector<32x16xf32>
    %cst_81 = arith.constant dense<0.000000e+00> : vector<2x16xf32>
    %187 = tpu.matmul %185, %186, %cst_81 {dimension_numbers = #tpu.dot_dimension_numbers<[1], [0], [0], [1], [0, 0, 1, 1], [], []>} : vector<2x32xf32>, vector<32x16xf32>, vector<2x16xf32> -> vector<2x16xf32>
    %c0_82 = arith.constant 0 : index
    %c0_83 = arith.constant 0 : index
    %188 = vector.load %arg15[%c0_82, %c0_83] : memref<1x16xf32, #tpu.memory_space<vmem>>, vector<1x16xf32>
    %189 = vector.broadcast %188 : vector<1x16xf32> to vector<2x16xf32>
    %190 = arith.addf %187, %189 : vector<2x16xf32>
    %cst_84 = arith.constant 0.000000e+00 : f32
    %191 = vector.broadcast %cst_84 : f32 to vector<2x16xf32>
    %192 = arith.maximumf %190, %191 : vector<2x16xf32>
    %c0_85 = arith.constant 0 : index
    %c0_86 = arith.constant 0 : index
    %193 = vector.load %arg16[%c0_85, %c0_86] : memref<16x1xf32, #tpu.memory_space<vmem>>, vector<16x1xf32>
    %cst_87 = arith.constant dense<0.000000e+00> : vector<2x1xf32>
    %194 = tpu.matmul %192, %193, %cst_87 {dimension_numbers = #tpu.dot_dimension_numbers<[1], [0], [0], [1], [0, 0, 1, 1], [], []>} : vector<2x16xf32>, vector<16x1xf32>, vector<2x1xf32> -> vector<2x1xf32>
    %c0_88 = arith.constant 0 : index
    %c0_89 = arith.constant 0 : index
    %195 = vector.load %arg17[%c0_88, %c0_89] : memref<1x1xf32, #tpu.memory_space<vmem>>, vector<1x1xf32>
    %196 = vector.broadcast %195 : vector<1x1xf32> to vector<2x1xf32>
    %197 = arith.addf %194, %196 : vector<2x1xf32>
    %c0_90 = arith.constant 0 : index
    %c0_91 = arith.constant 0 : index
    %198 = vector.load %arg18[%c0_90, %c0_91] : memref<2x1xf32, #tpu.memory_space<vmem>>, vector<2x1xf32>
    tpu.vector_store %arg18[%c0_90, %c0_91], %197 {strides = array<i32>} : memref<2x1xf32, #tpu.memory_space<vmem>>, vector<2x1xf32>,
    return
  }
}

</mosaic_0001>

<llo_original>
// kernel: graph_transformer_forward.1
$region0: #{graph_transformer_forward.1}
  #allocation0 [shape = 'u32[]', space=smem, size = 0x4, offset = 0x4, fixed_abs, tag = 'smem constant byte address 0x4 - core index']
  #allocation1 [shape = 'u32[72,128]{1,0:T(1,128)}', space=vmem, size = 0x9000, scoped, tag = 'internal scratch']
  #allocation2 [shape = 'f32[1,1]{1,0:T(1,128)S(1)}', space=vmem, size = 0x200, scoped, tag = 'scoped memory for graph_transformer_forward.1']
  %s0 = inlined_call_operand.vmem [shape: f32[16,16], index: 0, kind: input, shape index: {}]
  %s1 = inlined_call_operand.vmem [shape: f32[16,32], index: 1, kind: input, shape index: {}]
  %s2 = inlined_call_operand.vmem [shape: f32[1,32], index: 2, kind: input, shape index: {}]
  %s3 = inlined_call_operand.vmem [shape: f32[64,64], index: 3, kind: input, shape index: {}]
  %s4 = inlined_call_operand.hbm [shape: f32[64,64], index: 4, kind: input, shape index: {}]
  %s5 = inlined_call_operand.vmem [shape: f32[64,32], index: 5, kind: input, shape index: {}]
  %s6 = inlined_call_operand.hbm [shape: f32[2,32,128], index: 6, kind: input, shape index: {}]
  %s7 = inlined_call_operand.vmem [shape: f32[2,1,128], index: 7, kind: input, shape index: {}]
  %s8 = inlined_call_operand.vmem [shape: f32[2,1,32], index: 8, kind: input, shape index: {}]
  %s9 = inlined_call_operand.vmem [shape: f32[2,1,32], index: 9, kind: input, shape index: {}]
  %s10 = inlined_call_operand.vmem [shape: f32[2,1,32], index: 10, kind: input, shape index: {}]
  %s11 = inlined_call_operand.vmem [shape: f32[2,1,32], index: 11, kind: input, shape index: {}]
  %s12 = inlined_call_operand.vmem [shape: f32[2,16], index: 12, kind: input, shape index: {}]
  %s13 = inlined_call_operand.vmem [shape: f32[2,1], index: 13, kind: input, shape index: {}]
  %s14 = inlined_call_operand.vmem [shape: f32[32,16], index: 14, kind: input, shape index: {}]
  %s15 = inlined_call_operand.vmem [shape: f32[1,16], index: 15, kind: input, shape index: {}]
  %s16 = inlined_call_operand.vmem [shape: f32[16,1], index: 16, kind: input, shape index: {}]
  %s17 = inlined_call_operand.<no memory space> [shape: f32[1,1], index: 17, kind: input, shape index: {}]
  %s18 = inlined_call_operand.vmem [shape: f32[2,1], index: 18, kind: output, shape index: {}]
  %s19 = sld [smem:[#allocation0]]
  $region90: #{graph_transformer_forward.1} parent=0
    _
  %s21 = ssub.s32 1, %s19
  %s22 = scalar_select 0, %s21, %s19
  %v23 = vstv %s17
  %24 = vst [vmem:[#allocation2] sm:$0x1] %v23
  $region1: #{graph_transformer_forward.1} parent=0
    #allocation3 [shape = 'u8[32768]{0}', space=vmem, size = 0x8000, scoped, tag = 'input window, operand 4, single buffered']
    #allocation4 [shape = 's32[1]{0}', space=sflag, size = 0x4, scoped, tag = 'scoped memory for graph_transformer_forward.1']
    #allocation5 [shape = 'u8[32768]{0}', space=vmem, size = 0x8000, scoped, tag = 'input window, operand 6, single buffered']
    #allocation6 [shape = 's32[1]{0}', space=sflag, size = 0x4, scoped, tag = 'scoped memory for graph_transformer_forward.1']
    %25 = vsyncpa [#allocation4], 0
    %26 = vsyncpa [#allocation6], 0
    // Predicated region
    $region2: #{graph_transformer_forward.1} parent=1 // pred_check
      _
    $region3: #{graph_transformer_forward.1} parent=1 // pred_check_branch
      %28 = sbr.rel (0) target = $region5
    $region4: #{graph_transformer_forward.1} parent=1 // pred_region
      _
    $region5: #{graph_transformer_forward.1} parent=1 // pred_fallthru
      _
    // Predicated region
    $region6: #{graph_transformer_forward.1} parent=1 // pred_check
      _
    $region7: #{graph_transformer_forward.1} parent=1 // pred_check_branch
      %30 = sbr.rel (0) target = $region9
    $region8: #{graph_transformer_forward.1} parent=1 // pred_region
      _
    $region9: #{graph_transformer_forward.1} parent=1 // pred_fallthru
      _
    // Predicated region
    $region10: #{graph_transformer_forward.1} parent=1 // pred_check
      _
    $region11: #{graph_transformer_forward.1} parent=1 // pred_check_branch
      %32 = sbr.rel (0) target = $region13
    $region12: #{graph_transformer_forward.1} parent=1 // pred_region
      _
    $region13: #{graph_transformer_forward.1} parent=1 // pred_fallthru
      _
    // Predicated region
    $region14: #{graph_transformer_forward.1} parent=1 // pred_check
      _
    $region15: #{graph_transformer_forward.1} parent=1 // pred_check_branch
      %34 = sbr.rel (0) target = $region17
    $region16: #{graph_transformer_forward.1} parent=1 // pred_region
      _
    $region17: #{graph_transformer_forward.1} parent=1 // pred_fallthru
      _
    // Predicated region
    $region18: #{graph_transformer_forward.1} parent=1 // pred_check
      _
    $region19: #{graph_transformer_forward.1} parent=1 // pred_check_branch
      %36 = sbr.rel (0) target = $region21
    $region20: #{graph_transformer_forward.1} parent=1 // pred_region
      %38 = vsyncadd [#allocation4], 0
      %s39 = sshll.u32 %s4, 4
      %s40 = int_to_ptr.hbm [resolvable:$true] %s39
      %s41 = sshll.u32 [#allocation3], 4
      %s42 = int_to_ptr.vmem [resolvable:$true] %s41
      %47 = dma.hbm_to_vmem [thread:$0]  %s40, 1024, %s42, [#allocation4], 128, 128, 8
    $region21: #{graph_transformer_forward.1} parent=1 // pred_fallthru
      _
    // Predicated region
    $region22: #{graph_transformer_forward.1} parent=1 // pred_check
      _
    $region23: #{graph_transformer_forward.1} parent=1 // pred_check_branch
      %49 = sbr.rel (0) target = $region25
    $region24: #{graph_transformer_forward.1} parent=1 // pred_region
      _
    $region25: #{graph_transformer_forward.1} parent=1 // pred_fallthru
      _
    // Predicated region
    $region26: #{graph_transformer_forward.1} parent=1 // pred_check
      _
    $region27: #{graph_transformer_forward.1} parent=1 // pred_check_branch
      %51 = sbr.rel (0) target = $region29
    $region28: #{graph_transformer_forward.1} parent=1 // pred_region
      %53 = vsyncadd [#allocation6], 0
      %s54 = sshll.u32 %s6, 4
      %s55 = int_to_ptr.hbm [resolvable:$true] %s54
      %s56 = sshll.u32 [#allocation5], 4
      %s57 = int_to_ptr.vmem [resolvable:$true] %s56
      %62 = dma.hbm_to_vmem [thread:$0]  %s55, 1024, %s57, [#allocation6], 128, 128, 8
    $region29: #{graph_transformer_forward.1} parent=1 // pred_fallthru
      _
    // Predicated region
    $region30: #{graph_transformer_forward.1} parent=1 // pred_check
      _
    $region31: #{graph_transformer_forward.1} parent=1 // pred_check_branch
      %64 = sbr.rel (0) target = $region33
    $region32: #{graph_transformer_forward.1} parent=1 // pred_region
      _
    $region33: #{graph_transformer_forward.1} parent=1 // pred_fallthru
      _
    // Predicated region
    $region34: #{graph_transformer_forward.1} parent=1 // pred_check
      _
    $region35: #{graph_transformer_forward.1} parent=1 // pred_check_branch
      %66 = sbr.rel (0) target = $region37
    $region36: #{graph_transformer_forward.1} parent=1 // pred_region
      _
    $region37: #{graph_transformer_forward.1} parent=1 // pred_fallthru
      _
    // Predicated region
    $region38: #{graph_transformer_forward.1} parent=1 // pred_check
      _
    $region39: #{graph_transformer_forward.1} parent=1 // pred_check_branch
      %68 = sbr.rel (0) target = $region41
    $region40: #{graph_transformer_forward.1} parent=1 // pred_region
      _
    $region41: #{graph_transformer_forward.1} parent=1 // pred_fallthru
      _
    // Predicated region
    $region42: #{graph_transformer_forward.1} parent=1 // pred_check
      _
    $region43: #{graph_transformer_forward.1} parent=1 // pred_check_branch
      %70 = sbr.rel (0) target = $region45
    $region44: #{graph_transformer_forward.1} parent=1 // pred_region
      _
    $region45: #{graph_transformer_forward.1} parent=1 // pred_fallthru
      _
    // Predicated region
    $region46: #{graph_transformer_forward.1} parent=1 // pred_check
      _
    $region47: #{graph_transformer_forward.1} parent=1 // pred_check_branch
      %72 = sbr.rel (0) target = $region49
    $region48: #{graph_transformer_forward.1} parent=1 // pred_region
      _
    $region49: #{graph_transformer_forward.1} parent=1 // pred_fallthru
      _
    // Predicated region
    $region50: #{graph_transformer_forward.1} parent=1 // pred_check
      _
    $region51: #{graph_transformer_forward.1} parent=1 // pred_check_branch
      %74 = sbr.rel (0) target = $region53
    $region52: #{graph_transformer_forward.1} parent=1 // pred_region
      _
    $region53: #{graph_transformer_forward.1} parent=1 // pred_fallthru
      _
    // Predicated region
    $region54: #{graph_transformer_forward.1} parent=1 // pred_check
      _
    $region55: #{graph_transformer_forward.1} parent=1 // pred_check_branch
      %76 = sbr.rel (0) target = $region57
    $region56: #{graph_transformer_forward.1} parent=1 // pred_region
      _
    $region57: #{graph_transformer_forward.1} parent=1 // pred_fallthru
      _
    // Predicated region
    $region58: #{graph_transformer_forward.1} parent=1 // pred_check
      _
    $region59: #{graph_transformer_forward.1} parent=1 // pred_check_branch
      %78 = sbr.rel (0) target = $region61
    $region60: #{graph_transformer_forward.1} parent=1 // pred_region
      _
    $region61: #{graph_transformer_forward.1} parent=1 // pred_fallthru
      _
    // Predicated region
    $region62: #{graph_transformer_forward.1} parent=1 // pred_check
      _
    $region63: #{graph_transformer_forward.1} parent=1 // pred_check_branch
      %80 = sbr.rel (0) target = $region65
    $region64: #{graph_transformer_forward.1} parent=1 // pred_region
      _
    $region65: #{graph_transformer_forward.1} parent=1 // pred_fallthru
      _
    // Predicated region
    $region66: #{graph_transformer_forward.1} parent=1 // pred_check
      _
    $region67: #{graph_transformer_forward.1} parent=1 // pred_check_branch
      %82 = sbr.rel (0) target = $region69
    $region68: #{graph_transformer_forward.1} parent=1 // pred_region
      _
    $region69: #{graph_transformer_forward.1} parent=1 // pred_fallthru
      _
    // Predicated region
    $region70: #{graph_transformer_forward.1} parent=1 // pred_check
      _
    $region71: #{graph_transformer_forward.1} parent=1 // pred_check_branch
      %84 = sbr.rel (0) target = $region73
    $region72: #{graph_transformer_forward.1} parent=1 // pred_region
      _
    $region73: #{graph_transformer_forward.1} parent=1 // pred_fallthru
      _
    // Predicated region
    $region74: #{graph_transformer_forward.1} parent=1 // pred_check
      _
    $region75: #{graph_transformer_forward.1} parent=1 // pred_check_branch
      %86 = sbr.rel (0) target = $region77
    $region76: #{graph_transformer_forward.1} parent=1 // pred_region
      %88 = dma.done [#allocation4], 1024
    $region77: #{graph_transformer_forward.1} parent=1 // pred_fallthru
      _
    // Predicated region
    $region78: #{graph_transformer_forward.1} parent=1 // pred_check
      _
    $region79: #{graph_transformer_forward.1} parent=1 // pred_check_branch
      %90 = sbr.rel (0) target = $region81
    $region80: #{graph_transformer_forward.1} parent=1 // pred_region
      %92 = dma.done [#allocation6], 1024
    $region81: #{graph_transformer_forward.1} parent=1 // pred_fallthru
      _
    %v93 = vld [vmem:[%s0] sm:$0xff]
    %v94 = vld [vmem:[%s0 + $0x8] sm:$0xff]
    %v95 = vld [vmem:[%s1] sm:$0xff]
    %v96 = vld [vmem:[%s1 + $0x8] sm:$0xff]
    %v97 = vld [vmem:[%s2] sm:$0x1]
    %v99 = vperm.slane %v97, 0
    %vm101 = vcmask 130048
    %v103 = vsel %vm101, %v93, 0
    %v106 = vsel %vm101, %v94, 0
    %108 = vmatpush.msra.mxu0 0.0
    %109 = vmatpush.msra.mxu0 0.0
    %110 = vmatpush.msra.mxu0 0.0
    %111 = vmatpush.msra.mxu0 0.0
    %112 = vmatpush.msra.mxu0 0.0
    %113 = vmatpush.msra.mxu0 0.0
    %114 = vmatpush.msra.mxu0 0.0
    %115 = vmatpush.msra.mxu0 0.0
    %116 = vmatpush.msra.mxu0 0.0
    %117 = vmatpush.msra.mxu0 0.0
    %118 = vmatpush.msra.mxu0 0.0
    %119 = vmatpush.msra.mxu0 0.0
    %120 = vmatpush.msra.mxu0 0.0
    %121 = vmatpush.msra.mxu0 0.0
    %122 = vmatpush.msra.mxu0 %v96
    %123 = vmatpush.msra.mxu0 %v95
    %124 = vmatmul.f32.gmra.mxu0 %v103
    %v125 = vpop.f32.mrf.mxu0
    %v126 = vadd.f32 %v99, %v125
    %127 = vmatmul.f32.gmra.mxu0 %v106
    %v128 = vpop.f32.mrf.mxu0
    %v129 = vadd.f32 %v99, %v128
    %130 = vdwg.mxu0
    %v131 = vld [vmem:[%s3] sm:$0xff]
    %v132 = vld [vmem:[%s3 + $0x8] sm:$0xff]
    %v133 = vld [vmem:[%s3 + $0x10] sm:$0xff]
    %v134 = vld [vmem:[%s3 + $0x18] sm:$0xff]
    %v135 = vld [vmem:[%s3 + $0x20] sm:$0xff]
    %v136 = vld [vmem:[%s3 + $0x28] sm:$0xff]
    %v137 = vld [vmem:[%s3 + $0x30] sm:$0xff]
    %v138 = vld [vmem:[%s3 + $0x38] sm:$0xff]
    %v139 = vld [vmem:[#allocation3] sm:$0xff]
    %v140 = vld [vmem:[#allocation3 + $0x8] sm:$0xff]
    %v141 = vld [vmem:[#allocation3 + $0x10] sm:$0xff]
    %v142 = vld [vmem:[#allocation3 + $0x18] sm:$0xff]
    %v143 = vld [vmem:[#allocation3 + $0x20] sm:$0xff]
    %v144 = vld [vmem:[#allocation3 + $0x28] sm:$0xff]
    %v145 = vld [vmem:[#allocation3 + $0x30] sm:$0xff]
    %v146 = vld [vmem:[#allocation3 + $0x38] sm:$0xff]
    %v147 = vld [vmem:[%s5] sm:$0xff]
    %v148 = vld [vmem:[%s5 + $0x8] sm:$0xff]
    %v149 = vld [vmem:[%s5 + $0x10] sm:$0xff]
    %v150 = vld [vmem:[%s5 + $0x18] sm:$0xff]
    %v151 = vld [vmem:[%s5 + $0x20] sm:$0xff]
    %v152 = vld [vmem:[%s5 + $0x28] sm:$0xff]
    %v153 = vld [vmem:[%s5 + $0x30] sm:$0xff]
    %v154 = vld [vmem:[%s5 + $0x38] sm:$0xff]
    %v155 = vld [vmem:[#allocation5] sm:$0xff]
    %v156 = vld [vmem:[#allocation5 + $0x8] sm:$0xff]
    %v157 = vld [vmem:[#allocation5 + $0x10] sm:$0xff]
    %v158 = vld [vmem:[#allocation5 + $0x18] sm:$0xff]
    %v159 = vld [vmem:[%s7] sm:$0x1]
    %v161 = vperm.slane %v159, 0
    %vm163 = vcmask 261120
    %v165 = vsel %vm163, %v126, 0
    %v168 = vsel %vm163, %v129, 0
    %170 = vmatpush.msra.mxu0 0.0
    %171 = vmatpush.msra.mxu0 0.0
    %172 = vmatpush.msra.mxu0 0.0
    %173 = vmatpush.msra.mxu0 0.0
    %174 = vmatpush.msra.mxu0 0.0
    %175 = vmatpush.msra.mxu0 0.0
    %176 = vmatpush.msra.mxu0 0.0
    %177 = vmatpush.msra.mxu0 0.0
    %178 = vmatpush.msra.mxu0 0.0
    %179 = vmatpush.msra.mxu0 0.0
    %180 = vmatpush.msra.mxu0 0.0
    %181 = vmatpush.msra.mxu0 0.0
    %182 = vmatpush.msra.mxu0 %v158
    %183 = vmatpush.msra.mxu0 %v157
    %184 = vmatpush.msra.mxu0 %v156
    %185 = vmatpush.msra.mxu0 %v155
    %186 = vmatmul.f32.gmra.mxu0 %v165
    %v187 = vpop.f32.mrf.mxu0
    %v188 = vadd.f32 %v161, %v187
    %189 = vmatmul.f32.gmra.mxu0 %v168
    %v190 = vpop.f32.mrf.mxu0
    %v191 = vadd.f32 %v161, %v190
    %192 = vmatmul.f32.gmra.mxu0 %v165
    %v193 = vpop.f32.mrf.mxu0
    %v194 = vadd.f32 %v161, %v193
    %195 = vmatmul.f32.gmra.mxu0 %v168
    %v196 = vpop.f32.mrf.mxu0
    %v197 = vadd.f32 %v161, %v196
    %198 = vmatmul.f32.gmra.mxu0 %v165
    %v199 = vpop.f32.mrf.mxu0
    %v200 = vadd.f32 %v161, %v199
    %201 = vmatmul.f32.gmra.mxu0 %v168
    %v202 = vpop.f32.mrf.mxu0
    %v203 = vadd.f32 %v161, %v202
    %204 = vmatmul.f32.gmra.mxu0 %v165
    %v205 = vpop.f32.mrf.mxu0
    %v206 = vadd.f32 %v161, %v205
    %207 = vmatmul.f32.gmra.mxu0 %v168
    %v208 = vpop.f32.mrf.mxu0
    %v209 = vadd.f32 %v161, %v208
    %210 = vdwg.mxu0
    %v211 = vmul.f32 %v188, %v147
    %v212 = vmul.f32 %v191, %v148
    %v213 = vmul.f32 %v194, %v149
    %v214 = vmul.f32 %v197, %v150
    %v215 = vmul.f32 %v200, %v151
    %v216 = vmul.f32 %v203, %v152
    %v217 = vmul.f32 %v206, %v153
    %v218 = vmul.f32 %v209, %v154
    %227 = vrot.lane.b32.xlu0 %v188, 96
    %v228 = vpop.permute.xlu0 %227
    %229 = vrot.lane.b32.xlu0 %v191, 96
    %v230 = vpop.permute.xlu0 %229
    %231 = vrot.lane.b32.xlu0 %v194, 96
    %v232 = vpop.permute.xlu0 %231
    %233 = vrot.lane.b32.xlu0 %v197, 96
    %v234 = vpop.permute.xlu0 %233
    %235 = vrot.lane.b32.xlu0 %v200, 96
    %v236 = vpop.permute.xlu0 %235
    %237 = vrot.lane.b32.xlu0 %v203, 96
    %v238 = vpop.permute.xlu0 %237
    %239 = vrot.lane.b32.xlu0 %v206, 96
    %v240 = vpop.permute.xlu0 %239
    %241 = vrot.lane.b32.xlu0 %v209, 96
    %v242 = vpop.permute.xlu0 %241
    %v244 = vsel %vm163, %v211, 0
    %v247 = vsel %vm163, %v212, 0
    %v250 = vsel %vm163, %v213, 0
    %v253 = vsel %vm163, %v214, 0
    %v256 = vsel %vm163, %v215, 0
    %v259 = vsel %vm163, %v216, 0
    %v262 = vsel %vm163, %v217, 0
    %v265 = vsel %vm163, %v218, 0
    %v267 = vsel %vm163, %v228, 0
    %v269 = vsel %vm163, %v230, 0
    %v271 = vsel %vm163, %v232, 0
    %v273 = vsel %vm163, %v234, 0
    %v275 = vsel %vm163, %v236, 0
    %v277 = vsel %vm163, %v238, 0
    %v279 = vsel %vm163, %v240, 0
    %v281 = vsel %vm163, %v242, 0
    %283 = vmatpush.xpose.msra.mxu0 0.0
    %284 = vmatpush.xpose.msra.mxu0 0.0
    %285 = vmatpush.xpose.msra.mxu0 0.0
    %286 = vmatpush.xpose.msra.mxu0 0.0
    %287 = vmatpush.xpose.msra.mxu0 0.0
    %288 = vmatpush.xpose.msra.mxu0 0.0
    %289 = vmatpush.xpose.msra.mxu0 0.0
    %290 = vmatpush.xpose.msra.mxu0 0.0
    %291 = vmatpush.xpose.msra.mxu0 %v281
    %292 = vmatpush.xpose.msra.mxu0 %v279
    %293 = vmatpush.xpose.msra.mxu0 %v277
    %294 = vmatpush.xpose.msra.mxu0 %v275
    %295 = vmatpush.xpose.msra.mxu0 %v273
    %296 = vmatpush.xpose.msra.mxu0 %v271
    %297 = vmatpush.xpose.msra.mxu0 %v269
    %298 = vmatpush.xpose.msra.mxu0 %v267
    %299 = vmatmul.f32.gmra.mxu0 %v244
    %v300 = vpop.f32.mrf.mxu0
    %v301 = vadd.f32 %v131, %v300
    %302 = vmatmul.f32.gmra.mxu0 %v247
    %v303 = vpop.f32.mrf.mxu0
    %v304 = vadd.f32 %v132, %v303
    %305 = vmatmul.f32.gmra.mxu0 %v250
    %v306 = vpop.f32.mrf.mxu0
    %v307 = vadd.f32 %v133, %v306
    %308 = vmatmul.f32.gmra.mxu0 %v253
    %v309 = vpop.f32.mrf.mxu0
    %v310 = vadd.f32 %v134, %v309
    %311 = vmatmul.f32.gmra.mxu0 %v256
    %v312 = vpop.f32.mrf.mxu0
    %v313 = vadd.f32 %v135, %v312
    %314 = vmatmul.f32.gmra.mxu0 %v259
    %v315 = vpop.f32.mrf.mxu0
    %v316 = vadd.f32 %v136, %v315
    %317 = vmatmul.f32.gmra.mxu0 %v262
    %v318 = vpop.f32.mrf.mxu0
    %v319 = vadd.f32 %v137, %v318
    %320 = vmatmul.f32.gmra.mxu0 %v265
    %v321 = vpop.f32.mrf.mxu0
    %v322 = vadd.f32 %v138, %v321
    %323 = vdwg.mxu0
    %vm324 = vcmask 523264
    %v325 = vsel %vm324, %v301, -inf
    %326 = vmax.xlane.f32.xlu0 %v325
    %v327 = vpop.xlane.xlu0 %326
    %v328 = vsel %vm324, %v304, -inf
    %329 = vmax.xlane.f32.xlu0 %v328
    %v330 = vpop.xlane.xlu0 %329
    %v331 = vsel %vm324, %v307, -inf
    %332 = vmax.xlane.f32.xlu0 %v331
    %v333 = vpop.xlane.xlu0 %332
    %v334 = vsel %vm324, %v310, -inf
    %335 = vmax.xlane.f32.xlu0 %v334
    %v336 = vpop.xlane.xlu0 %335
    %v337 = vsel %vm324, %v313, -inf
    %338 = vmax.xlane.f32.xlu0 %v337
    %v339 = vpop.xlane.xlu0 %338
    %v340 = vsel %vm324, %v316, -inf
    %341 = vmax.xlane.f32.xlu0 %v340
    %v342 = vpop.xlane.xlu0 %341
    %v343 = vsel %vm324, %v319, -inf
    %344 = vmax.xlane.f32.xlu0 %v343
    %v345 = vpop.xlane.xlu0 %344
    %v346 = vsel %vm324, %v322, -inf
    %347 = vmax.xlane.f32.xlu0 %v346
    %v348 = vpop.xlane.xlu0 %347
    %v349 = vsub.f32 %v301, %v327
    %v350 = vsub.f32 %v304, %v330
    %v351 = vsub.f32 %v307, %v333
    %v352 = vsub.f32 %v310, %v336
    %v353 = vsub.f32 %v313, %v339
    %v354 = vsub.f32 %v316, %v342
    %v355 = vsub.f32 %v319, %v345
    %v356 = vsub.f32 %v322, %v348
    %v357 = vmul.f32 %v349, 1.442695
    %v358 = vpow.pop %v357
    %v359 = vmul.f32 %v350, 1.442695
    %v360 = vpow.pop %v359
    %v361 = vmul.f32 %v351, 1.442695
    %v362 = vpow.pop %v361
    %v363 = vmul.f32 %v352, 1.442695
    %v364 = vpow.pop %v363
    %v365 = vmul.f32 %v353, 1.442695
    %v366 = vpow.pop %v365
    %v367 = vmul.f32 %v354, 1.442695
    %v368 = vpow.pop %v367
    %v369 = vmul.f32 %v355, 1.442695
    %v370 = vpow.pop %v369
    %v371 = vmul.f32 %v356, 1.442695
    %v372 = vpow.pop %v371
    %v373 = vmul.f32 %v358, %v139
    %v374 = vmul.f32 %v360, %v140
    %v375 = vmul.f32 %v362, %v141
    %v376 = vmul.f32 %v364, %v142
    %v377 = vmul.f32 %v366, %v143
    %v378 = vmul.f32 %v368, %v144
    %v379 = vmul.f32 %v370, %v145
    %v380 = vmul.f32 %v372, %v146
    %v381 = vsel %vm324, %v373, 0.0
    %382 = vadd.xlane.f32.xlu0 %v381
    %v383 = vpop.xlane.xlu0 %382
    %v384 = vsel %vm324, %v374, 0.0
    %385 = vadd.xlane.f32.xlu0 %v384
    %v386 = vpop.xlane.xlu0 %385
    %v387 = vsel %vm324, %v375, 0.0
    %388 = vadd.xlane.f32.xlu0 %v387
    %v389 = vpop.xlane.xlu0 %388
    %v390 = vsel %vm324, %v376, 0.0
    %391 = vadd.xlane.f32.xlu0 %v390
    %v392 = vpop.xlane.xlu0 %391
    %v393 = vsel %vm324, %v377, 0.0
    %394 = vadd.xlane.f32.xlu0 %v393
    %v395 = vpop.xlane.xlu0 %394
    %v396 = vsel %vm324, %v378, 0.0
    %397 = vadd.xlane.f32.xlu0 %v396
    %v398 = vpop.xlane.xlu0 %397
    %v399 = vsel %vm324, %v379, 0.0
    %400 = vadd.xlane.f32.xlu0 %v399
    %v401 = vpop.xlane.xlu0 %400
    %v402 = vsel %vm324, %v380, 0.0
    %403 = vadd.xlane.f32.xlu0 %v402
    %v404 = vpop.xlane.xlu0 %403
    %v405 = vmax.f32 %v383, 1e-30
    %v406 = vmax.f32 %v386, 1e-30
    %v407 = vmax.f32 %v389, 1e-30
    %v408 = vmax.f32 %v392, 1e-30
    %v409 = vmax.f32 %v395, 1e-30
    %v410 = vmax.f32 %v398, 1e-30
    %v411 = vmax.f32 %v401, 1e-30
    %v412 = vmax.f32 %v404, 1e-30
    %v413 = vrcp.pop %v405
    %v414 = vmul.f32 %v405, %v413
    %v415 = vsub.f32 1.0, %v414
    %v416 = vmul.f32 %v413, %v415
    %v417 = vadd.f32 %v413, %v416
    %vm418 = vweird.f32 %v405
    %vm419 = vweird.f32 %v413
    %vm420 = vmor %vm418, %vm419
    %v421 = vsel %vm420, %v413, %v417
    %v422 = vand.u32 2147483647, %v405
    %vm423 = vcmp.eq.f32.partialorder %v422, 8.507059e+37
    %v424 = vand.u32 %v405, 2147483648
    %v425 = vor.u32 1.1754944e-38, %v424
    %v426 = vsel %vm423, %v425, %v421
    %v427 = vmul.f32 %v373, %v426
    %v428 = vrcp.pop %v406
    %v429 = vmul.f32 %v406, %v428
    %v430 = vsub.f32 1.0, %v429
    %v431 = vmul.f32 %v428, %v430
    %v432 = vadd.f32 %v428, %v431
    %vm433 = vweird.f32 %v406
    %vm434 = vweird.f32 %v428
    %vm435 = vmor %vm433, %vm434
    %v436 = vsel %vm435, %v428, %v432
    %v437 = vand.u32 2147483647, %v406
    %vm438 = vcmp.eq.f32.partialorder %v437, 8.507059e+37
    %v439 = vand.u32 %v406, 2147483648
    %v440 = vor.u32 1.1754944e-38, %v439
    %v441 = vsel %vm438, %v440, %v436
    %v442 = vmul.f32 %v374, %v441
    %v443 = vrcp.pop %v407
    %v444 = vmul.f32 %v407, %v443
    %v445 = vsub.f32 1.0, %v444
    %v446 = vmul.f32 %v443, %v445
    %v447 = vadd.f32 %v443, %v446
    %vm448 = vweird.f32 %v407
    %vm449 = vweird.f32 %v443
    %vm450 = vmor %vm448, %vm449
    %v451 = vsel %vm450, %v443, %v447
    %v452 = vand.u32 2147483647, %v407
    %vm453 = vcmp.eq.f32.partialorder %v452, 8.507059e+37
    %v454 = vand.u32 %v407, 2147483648
    %v455 = vor.u32 1.1754944e-38, %v454
    %v456 = vsel %vm453, %v455, %v451
    %v457 = vmul.f32 %v375, %v456
    %v458 = vrcp.pop %v408
    %v459 = vmul.f32 %v408, %v458
    %v460 = vsub.f32 1.0, %v459
    %v461 = vmul.f32 %v458, %v460
    %v462 = vadd.f32 %v458, %v461
    %vm463 = vweird.f32 %v408
    %vm464 = vweird.f32 %v458
    %vm465 = vmor %vm463, %vm464
    %v466 = vsel %vm465, %v458, %v462
    %v467 = vand.u32 2147483647, %v408
    %vm468 = vcmp.eq.f32.partialorder %v467, 8.507059e+37
    %v469 = vand.u32 %v408, 2147483648
    %v470 = vor.u32 1.1754944e-38, %v469
    %v471 = vsel %vm468, %v470, %v466
    %v472 = vmul.f32 %v376, %v471
    %v473 = vrcp.pop %v409
    %v474 = vmul.f32 %v409, %v473
    %v475 = vsub.f32 1.0, %v474
    %v476 = vmul.f32 %v473, %v475
    %v477 = vadd.f32 %v473, %v476
    %vm478 = vweird.f32 %v409
    %vm479 = vweird.f32 %v473
    %vm480 = vmor %vm478, %vm479
    %v481 = vsel %vm480, %v473, %v477
    %v482 = vand.u32 2147483647, %v409
    %vm483 = vcmp.eq.f32.partialorder %v482, 8.507059e+37
    %v484 = vand.u32 %v409, 2147483648
    %v485 = vor.u32 1.1754944e-38, %v484
    %v486 = vsel %vm483, %v485, %v481
    %v487 = vmul.f32 %v377, %v486
    %v488 = vrcp.pop %v410
    %v489 = vmul.f32 %v410, %v488
    %v490 = vsub.f32 1.0, %v489
    %v491 = vmul.f32 %v488, %v490
    %v492 = vadd.f32 %v488, %v491
    %vm493 = vweird.f32 %v410
    %vm494 = vweird.f32 %v488
    %vm495 = vmor %vm493, %vm494
    %v496 = vsel %vm495, %v488, %v492
    %v497 = vand.u32 2147483647, %v410
    %vm498 = vcmp.eq.f32.partialorder %v497, 8.507059e+37
    %v499 = vand.u32 %v410, 2147483648
    %v500 = vor.u32 1.1754944e-38, %v499
    %v501 = vsel %vm498, %v500, %v496
    %v502 = vmul.f32 %v378, %v501
    %v503 = vrcp.pop %v411
    %v504 = vmul.f32 %v411, %v503
    %v505 = vsub.f32 1.0, %v504
    %v506 = vmul.f32 %v503, %v505
    %v507 = vadd.f32 %v503, %v506
    %vm508 = vweird.f32 %v411
    %vm509 = vweird.f32 %v503
    %vm510 = vmor %vm508, %vm509
    %v511 = vsel %vm510, %v503, %v507
    %v512 = vand.u32 2147483647, %v411
    %vm513 = vcmp.eq.f32.partialorder %v512, 8.507059e+37
    %v514 = vand.u32 %v411, 2147483648
    %v515 = vor.u32 1.1754944e-38, %v514
    %v516 = vsel %vm513, %v515, %v511
    %v517 = vmul.f32 %v379, %v516
    %v518 = vrcp.pop %v412
    %v519 = vmul.f32 %v412, %v518
    %v520 = vsub.f32 1.0, %v519
    %v521 = vmul.f32 %v518, %v520
    %v522 = vadd.f32 %v518, %v521
    %vm523 = vweird.f32 %v412
    %vm524 = vweird.f32 %v518
    %vm525 = vmor %vm523, %vm524
    %v526 = vsel %vm525, %v518, %v522
    %v527 = vand.u32 2147483647, %v412
    %vm528 = vcmp.eq.f32.partialorder %v527, 8.507059e+37
    %v529 = vand.u32 %v412, 2147483648
    %v530 = vor.u32 1.1754944e-38, %v529
    %v531 = vsel %vm528, %v530, %v526
    %v532 = vmul.f32 %v380, %v531
    %533 = vrot.lane.b32.xlu0 %v188, 64
    %v534 = vpop.permute.xlu0 %533
    %535 = vrot.lane.b32.xlu0 %v191, 64
    %v536 = vpop.permute.xlu0 %535
    %537 = vrot.lane.b32.xlu0 %v194, 64
    %v538 = vpop.permute.xlu0 %537
    %539 = vrot.lane.b32.xlu0 %v197, 64
    %v540 = vpop.permute.xlu0 %539
    %541 = vrot.lane.b32.xlu0 %v200, 64
    %v542 = vpop.permute.xlu0 %541
    %543 = vrot.lane.b32.xlu0 %v203, 64
    %v544 = vpop.permute.xlu0 %543
    %545 = vrot.lane.b32.xlu0 %v206, 64
    %v546 = vpop.permute.xlu0 %545
    %547 = vrot.lane.b32.xlu0 %v209, 64
    %v548 = vpop.permute.xlu0 %547
    %v558 = vsel %vm324, %v427, 0
    %v561 = vsel %vm324, %v442, 0
    %v564 = vsel %vm324, %v457, 0
    %v567 = vsel %vm324, %v472, 0
    %v570 = vsel %vm324, %v487, 0
    %v573 = vsel %vm324, %v502, 0
    %v576 = vsel %vm324, %v517, 0
    %v579 = vsel %vm324, %v532, 0
    %581 = vmatpush.msra.mxu0 0.0
    %582 = vmatpush.msra.mxu0 0.0
    %583 = vmatpush.msra.mxu0 0.0
    %584 = vmatpush.msra.mxu0 0.0
    %585 = vmatpush.msra.mxu0 0.0
    %586 = vmatpush.msra.mxu0 0.0
    %587 = vmatpush.msra.mxu0 0.0
    %588 = vmatpush.msra.mxu0 0.0
    %589 = vmatpush.msra.mxu0 %v548
    %590 = vmatpush.msra.mxu0 %v546
    %591 = vmatpush.msra.mxu0 %v544
    %592 = vmatpush.msra.mxu0 %v542
    %593 = vmatpush.msra.mxu0 %v540
    %594 = vmatpush.msra.mxu0 %v538
    %595 = vmatpush.msra.mxu0 %v536
    %596 = vmatpush.msra.mxu0 %v534
    %597 = vmatmul.f32.gmra.mxu0 %v558
    %v598 = vpop.f32.mrf.mxu0
    %v599 = vadd.f32 0.0, %v598
    %600 = vmatmul.f32.gmra.mxu0 %v561
    %v601 = vpop.f32.mrf.mxu0
    %v602 = vadd.f32 0.0, %v601
    %603 = vmatmul.f32.gmra.mxu0 %v564
    %v604 = vpop.f32.mrf.mxu0
    %v605 = vadd.f32 0.0, %v604
    %606 = vmatmul.f32.gmra.mxu0 %v567
    %v607 = vpop.f32.mrf.mxu0
    %v608 = vadd.f32 0.0, %v607
    %609 = vmatmul.f32.gmra.mxu0 %v570
    %v610 = vpop.f32.mrf.mxu0
    %v611 = vadd.f32 0.0, %v610
    %612 = vmatmul.f32.gmra.mxu0 %v573
    %v613 = vpop.f32.mrf.mxu0
    %v614 = vadd.f32 0.0, %v613
    %615 = vmatmul.f32.gmra.mxu0 %v576
    %v616 = vpop.f32.mrf.mxu0
    %v617 = vadd.f32 0.0, %v616
    %618 = vmatmul.f32.gmra.mxu0 %v579
    %v619 = vpop.f32.mrf.mxu0
    %v620 = vadd.f32 0.0, %v619
    %621 = vdwg.mxu0
    %v622 = vmul.f32 %v599, %v147
    %v623 = vmul.f32 %v602, %v148
    %v624 = vmul.f32 %v605, %v149
    %v625 = vmul.f32 %v608, %v150
    %v626 = vmul.f32 %v611, %v151
    %v627 = vmul.f32 %v614, %v152
    %v628 = vmul.f32 %v617, %v153
    %v629 = vmul.f32 %v620, %v154
    %v630 = vadd.f32 %v622, %v624
    %v631 = vadd.f32 %v623, %v625
    %v632 = vadd.f32 %v630, %v626
    %v633 = vadd.f32 %v631, %v627
    %v634 = vadd.f32 %v632, %v628
    %v635 = vadd.f32 %v633, %v629
    %v636 = vld [vmem:[%s8] sm:$0x1]
    %v638 = vperm.slane %v636, 0
    %v640 = vmul.f32 %v634, %v638
    %v641 = vmul.f32 %v635, %v638
    %v642 = vld [vmem:[%s9] sm:$0x1]
    %v644 = vperm.slane %v642, 0
    %645 = vrot.lane.b32.xlu0 %v644, 96
    %v646 = vpop.permute.xlu0 %645
    %v648 = vmul.f32 %v188, %v646
    %v649 = vmul.f32 %v191, %v646
    %652 = vrot.lane.b32.xlu0 %v648, 32
    %v653 = vpop.permute.xlu0 %652
    %654 = vrot.lane.b32.xlu0 %v649, 32
    %v655 = vpop.permute.xlu0 %654
    %v658 = vadd.f32 %v640, %v653
    %v659 = vadd.f32 %v641, %v655
    %v660 = vsel %vm163, %v658, 0.0
    %661 = vadd.xlane.f32.xlu0 %v660
    %v662 = vpop.xlane.xlu0 %661
    %v663 = vsel %vm163, %v659, 0.0
    %664 = vadd.xlane.f32.xlu0 %v663
    %v665 = vpop.xlane.xlu0 %664
    %v666 = vxor.u32 %v662, 2147483648
    %v667 = vxor.u32 %v665, 2147483648
    %v668 = vmul.f32 %v666, 1.442695
    %v669 = vpow.pop %v668
    %v670 = vmul.f32 %v667, 1.442695
    %v671 = vpow.pop %v670
    %v672 = vadd.f32 %v669, 1.0
    %v673 = vadd.f32 %v671, 1.0
    %v674 = vrcp.pop %v672
    %v675 = vmul.f32 %v672, %v674
    %v676 = vsub.f32 1.0, %v675
    %v677 = vmul.f32 %v674, %v676
    %v678 = vadd.f32 %v674, %v677
    %vm679 = vweird.f32 %v672
    %vm680 = vweird.f32 %v674
    %vm681 = vmor %vm679, %vm680
    %v682 = vsel %vm681, %v674, %v678
    %v683 = vand.u32 2147483647, %v672
    %vm684 = vcmp.eq.f32.partialorder %v683, 8.507059e+37
    %v685 = vand.u32 %v672, 2147483648
    %v686 = vor.u32 1.1754944e-38, %v685
    %v687 = vsel %vm684, %v686, %v682
    %v688 = vmul.f32 1.0, %v687
    %v689 = vrcp.pop %v673
    %v690 = vmul.f32 %v673, %v689
    %v691 = vsub.f32 1.0, %v690
    %v692 = vmul.f32 %v689, %v691
    %v693 = vadd.f32 %v689, %v692
    %vm694 = vweird.f32 %v673
    %vm695 = vweird.f32 %v689
    %vm696 = vmor %vm694, %vm695
    %v697 = vsel %vm696, %v689, %v693
    %v698 = vand.u32 2147483647, %v673
    %vm699 = vcmp.eq.f32.partialorder %v698, 8.507059e+37
    %v700 = vand.u32 %v673, 2147483648
    %v701 = vor.u32 1.1754944e-38, %v700
    %v702 = vsel %vm699, %v701, %v697
    %v703 = vmul.f32 1.0, %v702
    %v704 = vmul.f32 %v688, %v188
    %v705 = vmul.f32 %v703, %v191
    %v706 = vsub.f32 1.0, %v688
    %v707 = vsub.f32 1.0, %v703
    %v708 = vmul.f32 %v706, %v634
    %v709 = vmul.f32 %v707, %v635
    %712 = vrot.lane.b32.xlu0 %v708, 96
    %v713 = vpop.permute.xlu0 %712
    %714 = vrot.lane.b32.xlu0 %v709, 96
    %v715 = vpop.permute.xlu0 %714
    %v718 = vadd.f32 %v704, %v713
    %v719 = vadd.f32 %v705, %v715
    %722 = vrot.lane.b32.xlu0 %v718, 32
    %v723 = vpop.permute.xlu0 %722
    %724 = vrot.lane.b32.xlu0 %v719, 32
    %v725 = vpop.permute.xlu0 %724
    %v728 = vadd.f32 %v126, %v723
    %v729 = vadd.f32 %v129, %v725
    %v730 = vsel %vm163, %v728, 0.0
    %731 = vadd.xlane.f32.xlu0 %v730
    %v732 = vpop.xlane.xlu0 %731
    %v733 = vsel %vm163, %v729, 0.0
    %734 = vadd.xlane.f32.xlu0 %v733
    %v735 = vpop.xlane.xlu0 %734
    %v736 = vrcp.pop 32.0
    %v737 = vmul.f32 32.0, %v736
    %v738 = vsub.f32 1.0, %v737
    %v739 = vmul.f32 %v736, %v738
    %v740 = vadd.f32 %v736, %v739
    %vm741 = vweird.f32 %v736
    %v742 = vsel %vm741, %v736, %v740
    %v743 = vmul.f32 %v732, %v742
    %v744 = vmul.f32 %v735, %v742
    %v745 = vsub.f32 %v728, %v743
    %v746 = vsub.f32 %v729, %v744
    %v747 = vmul.f32 %v745, %v745
    %v748 = vmul.f32 %v746, %v746
    %v749 = vsel %vm163, %v747, 0.0
    %750 = vadd.xlane.f32.xlu0 %v749
    %v751 = vpop.xlane.xlu0 %750
    %v752 = vsel %vm163, %v748, 0.0
    %753 = vadd.xlane.f32.xlu0 %v752
    %v754 = vpop.xlane.xlu0 %753
    %v755 = vmul.f32 %v751, %v742
    %v756 = vmul.f32 %v754, %v742
    %v757 = vadd.f32 %v755, 1e-05
    %v758 = vadd.f32 %v756, 1e-05
    %v759 = vrsqrt.pop %v757
    %v760 = vmul.f32 %v759, %v757
    %v761 = vmul.f32 %v760, %v759
    %v762 = vmul.f32 0.5, %v761
    %v763 = vsub.f32 1.5, %v762
    %v764 = vmul.f32 %v759, %v763
    %vm765 = vweird.f32 %v757
    %vm766 = vweird.f32 %v759
    %vm767 = vmor %vm765, %vm766
    %v768 = vsel %vm767, %v759, %v764
    %v769 = vrsqrt.pop %v758
    %v770 = vmul.f32 %v769, %v758
    %v771 = vmul.f32 %v770, %v769
    %v772 = vmul.f32 0.5, %v771
    %v773 = vsub.f32 1.5, %v772
    %v774 = vmul.f32 %v769, %v773
    %vm775 = vweird.f32 %v758
    %vm776 = vweird.f32 %v769
    %vm777 = vmor %vm775, %vm776
    %v778 = vsel %vm777, %v769, %v774
    %v779 = vmul.f32 %v745, %v768
    %v780 = vmul.f32 %v746, %v778
    %v781 = vld [vmem:[%s10] sm:$0x1]
    %v783 = vperm.slane %v781, 0
    %v785 = vmul.f32 %v779, %v783
    %v786 = vmul.f32 %v780, %v783
    %v787 = vld [vmem:[%s11] sm:$0x1]
    %v789 = vperm.slane %v787, 0
    %v791 = vadd.f32 %v785, %v789
    %v792 = vadd.f32 %v786, %v789
    %s793 = scalar_lea.vmem [#allocation5], 32
    %v794 = vld [vmem:[%s793] sm:$0xff]
    %v795 = vld [vmem:[%s793 + $0x8] sm:$0xff]
    %v796 = vld [vmem:[%s793 + $0x10] sm:$0xff]
    %v797 = vld [vmem:[%s793 + $0x18] sm:$0xff]
    %s798 = scalar_lea.vmem %s7, 1
    %v799 = vld [vmem:[%s798] sm:$0x1]
    %v801 = vperm.slane %v799, 0
    %v804 = vsel %vm163, %v791, 0
    %v807 = vsel %vm163, %v792, 0
    %809 = vmatpush.msra.mxu0 0.0
    %810 = vmatpush.msra.mxu0 0.0
    %811 = vmatpush.msra.mxu0 0.0
    %812 = vmatpush.msra.mxu0 0.0
    %813 = vmatpush.msra.mxu0 0.0
    %814 = vmatpush.msra.mxu0 0.0
    %815 = vmatpush.msra.mxu0 0.0
    %816 = vmatpush.msra.mxu0 0.0
    %817 = vmatpush.msra.mxu0 0.0
    %818 = vmatpush.msra.mxu0 0.0
    %819 = vmatpush.msra.mxu0 0.0
    %820 = vmatpush.msra.mxu0 0.0
    %821 = vmatpush.msra.mxu0 %v797
    %822 = vmatpush.msra.mxu0 %v796
    %823 = vmatpush.msra.mxu0 %v795
    %824 = vmatpush.msra.mxu0 %v794
    %825 = vmatmul.f32.gmra.mxu0 %v804
    %v826 = vpop.f32.mrf.mxu0
    %v827 = vadd.f32 %v801, %v826
    %828 = vmatmul.f32.gmra.mxu0 %v807
    %v829 = vpop.f32.mrf.mxu0
    %v830 = vadd.f32 %v801, %v829
    %831 = vmatmul.f32.gmra.mxu0 %v804
    %v832 = vpop.f32.mrf.mxu0
    %v833 = vadd.f32 %v801, %v832
    %834 = vmatmul.f32.gmra.mxu0 %v807
    %v835 = vpop.f32.mrf.mxu0
    %v836 = vadd.f32 %v801, %v835
    %837 = vmatmul.f32.gmra.mxu0 %v804
    %v838 = vpop.f32.mrf.mxu0
    %v839 = vadd.f32 %v801, %v838
    %840 = vmatmul.f32.gmra.mxu0 %v807
    %v841 = vpop.f32.mrf.mxu0
    %v842 = vadd.f32 %v801, %v841
    %843 = vmatmul.f32.gmra.mxu0 %v804
    %v844 = vpop.f32.mrf.mxu0
    %v845 = vadd.f32 %v801, %v844
    %846 = vmatmul.f32.gmra.mxu0 %v807
    %v847 = vpop.f32.mrf.mxu0
    %v848 = vadd.f32 %v801, %v847
    %849 = vdwg.mxu0
    %v850 = vmul.f32 %v827, %v147
    %v851 = vmul.f32 %v830, %v148
    %v852 = vmul.f32 %v833, %v149
    %v853 = vmul.f32 %v836, %v150
    %v854 = vmul.f32 %v839, %v151
    %v855 = vmul.f32 %v842, %v152
    %v856 = vmul.f32 %v845, %v153
    %v857 = vmul.f32 %v848, %v154
    %866 = vrot.lane.b32.xlu0 %v827, 96
    %v867 = vpop.permute.xlu0 %866
    %868 = vrot.lane.b32.xlu0 %v830, 96
    %v869 = vpop.permute.xlu0 %868
    %870 = vrot.lane.b32.xlu0 %v833, 96
    %v871 = vpop.permute.xlu0 %870
    %872 = vrot.lane.b32.xlu0 %v836, 96
    %v873 = vpop.permute.xlu0 %872
    %874 = vrot.lane.b32.xlu0 %v839, 96
    %v875 = vpop.permute.xlu0 %874
    %876 = vrot.lane.b32.xlu0 %v842, 96
    %v877 = vpop.permute.xlu0 %876
    %878 = vrot.lane.b32.xlu0 %v845, 96
    %v879 = vpop.permute.xlu0 %878
    %880 = vrot.lane.b32.xlu0 %v848, 96
    %v881 = vpop.permute.xlu0 %880
    %v883 = vsel %vm163, %v850, 0
    %v886 = vsel %vm163, %v851, 0
    %v889 = vsel %vm163, %v852, 0
    %v892 = vsel %vm163, %v853, 0
    %v895 = vsel %vm163, %v854, 0
    %v898 = vsel %vm163, %v855, 0
    %v901 = vsel %vm163, %v856, 0
    %v904 = vsel %vm163, %v857, 0
    %v906 = vsel %vm163, %v867, 0
    %v908 = vsel %vm163, %v869, 0
    %v910 = vsel %vm163, %v871, 0
    %v912 = vsel %vm163, %v873, 0
    %v914 = vsel %vm163, %v875, 0
    %v916 = vsel %vm163, %v877, 0
    %v918 = vsel %vm163, %v879, 0
    %v920 = vsel %vm163, %v881, 0
    %922 = vmatpush.xpose.msra.mxu0 0.0
    %923 = vmatpush.xpose.msra.mxu0 0.0
    %924 = vmatpush.xpose.msra.mxu0 0.0
    %925 = vmatpush.xpose.msra.mxu0 0.0
    %926 = vmatpush.xpose.msra.mxu0 0.0
    %927 = vmatpush.xpose.msra.mxu0 0.0
    %928 = vmatpush.xpose.msra.mxu0 0.0
    %929 = vmatpush.xpose.msra.mxu0 0.0
    %930 = vmatpush.xpose.msra.mxu0 %v920
    %931 = vmatpush.xpose.msra.mxu0 %v918
    %932 = vmatpush.xpose.msra.mxu0 %v916
    %933 = vmatpush.xpose.msra.mxu0 %v914
    %934 = vmatpush.xpose.msra.mxu0 %v912
    %935 = vmatpush.xpose.msra.mxu0 %v910
    %936 = vmatpush.xpose.msra.mxu0 %v908
    %937 = vmatpush.xpose.msra.mxu0 %v906
    %938 = vmatmul.f32.gmra.mxu0 %v883
    %v939 = vpop.f32.mrf.mxu0
    %v940 = vadd.f32 %v131, %v939
    %941 = vmatmul.f32.gmra.mxu0 %v886
    %v942 = vpop.f32.mrf.mxu0
    %v943 = vadd.f32 %v132, %v942
    %944 = vmatmul.f32.gmra.mxu0 %v889
    %v945 = vpop.f32.mrf.mxu0
    %v946 = vadd.f32 %v133, %v945
    %947 = vmatmul.f32.gmra.mxu0 %v892
    %v948 = vpop.f32.mrf.mxu0
    %v949 = vadd.f32 %v134, %v948
    %950 = vmatmul.f32.gmra.mxu0 %v895
    %v951 = vpop.f32.mrf.mxu0
    %v952 = vadd.f32 %v135, %v951
    %953 = vmatmul.f32.gmra.mxu0 %v898
    %v954 = vpop.f32.mrf.mxu0
    %v955 = vadd.f32 %v136, %v954
    %956 = vmatmul.f32.gmra.mxu0 %v901
    %v957 = vpop.f32.mrf.mxu0
    %v958 = vadd.f32 %v137, %v957
    %959 = vmatmul.f32.gmra.mxu0 %v904
    %v960 = vpop.f32.mrf.mxu0
    %v961 = vadd.f32 %v138, %v960
    %962 = vdwg.mxu0
    %v963 = vsel %vm324, %v940, -inf
    %964 = vmax.xlane.f32.xlu0 %v963
    %v965 = vpop.xlane.xlu0 %964
    %v966 = vsel %vm324, %v943, -inf
    %967 = vmax.xlane.f32.xlu0 %v966
    %v968 = vpop.xlane.xlu0 %967
    %v969 = vsel %vm324, %v946, -inf
    %970 = vmax.xlane.f32.xlu0 %v969
    %v971 = vpop.xlane.xlu0 %970
    %v972 = vsel %vm324, %v949, -inf
    %973 = vmax.xlane.f32.xlu0 %v972
    %v974 = vpop.xlane.xlu0 %973
    %v975 = vsel %vm324, %v952, -inf
    %976 = vmax.xlane.f32.xlu0 %v975
    %v977 = vpop.xlane.xlu0 %976
    %v978 = vsel %vm324, %v955, -inf
    %979 = vmax.xlane.f32.xlu0 %v978
    %v980 = vpop.xlane.xlu0 %979
    %v981 = vsel %vm324, %v958, -inf
    %982 = vmax.xlane.f32.xlu0 %v981
    %v983 = vpop.xlane.xlu0 %982
    %v984 = vsel %vm324, %v961, -inf
    %985 = vmax.xlane.f32.xlu0 %v984
    %v986 = vpop.xlane.xlu0 %985
    %v987 = vsub.f32 %v940, %v965
    %v988 = vsub.f32 %v943, %v968
    %v989 = vsub.f32 %v946, %v971
    %v990 = vsub.f32 %v949, %v974
    %v991 = vsub.f32 %v952, %v977
    %v992 = vsub.f32 %v955, %v980
    %v993 = vsub.f32 %v958, %v983
    %v994 = vsub.f32 %v961, %v986
    %v995 = vmul.f32 %v987, 1.442695
    %v996 = vpow.pop %v995
    %v997 = vmul.f32 %v988, 1.442695
    %v998 = vpow.pop %v997
    %v999 = vmul.f32 %v989, 1.442695
    %v1000 = vpow.pop %v999
    %v1001 = vmul.f32 %v990, 1.442695
    %v1002 = vpow.pop %v1001
    %v1003 = vmul.f32 %v991, 1.442695
    %v1004 = vpow.pop %v1003
    %v1005 = vmul.f32 %v992, 1.442695
    %v1006 = vpow.pop %v1005
    %v1007 = vmul.f32 %v993, 1.442695
    %v1008 = vpow.pop %v1007
    %v1009 = vmul.f32 %v994, 1.442695
    %v1010 = vpow.pop %v1009
    %v1011 = vmul.f32 %v996, %v139
    %v1012 = vmul.f32 %v998, %v140
    %v1013 = vmul.f32 %v1000, %v141
    %v1014 = vmul.f32 %v1002, %v142
    %v1015 = vmul.f32 %v1004, %v143
    %v1016 = vmul.f32 %v1006, %v144
    %v1017 = vmul.f32 %v1008, %v145
    %v1018 = vmul.f32 %v1010, %v146
    %v1019 = vsel %vm324, %v1011, 0.0
    %1020 = vadd.xlane.f32.xlu0 %v1019
    %v1021 = vpop.xlane.xlu0 %1020
    %v1022 = vsel %vm324, %v1012, 0.0
    %1023 = vadd.xlane.f32.xlu0 %v1022
    %v1024 = vpop.xlane.xlu0 %1023
    %v1025 = vsel %vm324, %v1013, 0.0
    %1026 = vadd.xlane.f32.xlu0 %v1025
    %v1027 = vpop.xlane.xlu0 %1026
    %v1028 = vsel %vm324, %v1014, 0.0
    %1029 = vadd.xlane.f32.xlu0 %v1028
    %v1030 = vpop.xlane.xlu0 %1029
    %v1031 = vsel %vm324, %v1015, 0.0
    %1032 = vadd.xlane.f32.xlu0 %v1031
    %v1033 = vpop.xlane.xlu0 %1032
    %v1034 = vsel %vm324, %v1016, 0.0
    %1035 = vadd.xlane.f32.xlu0 %v1034
    %v1036 = vpop.xlane.xlu0 %1035
    %v1037 = vsel %vm324, %v1017, 0.0
    %1038 = vadd.xlane.f32.xlu0 %v1037
    %v1039 = vpop.xlane.xlu0 %1038
    %v1040 = vsel %vm324, %v1018, 0.0
    %1041 = vadd.xlane.f32.xlu0 %v1040
    %v1042 = vpop.xlane.xlu0 %1041
    %v1043 = vmax.f32 %v1021, 1e-30
    %v1044 = vmax.f32 %v1024, 1e-30
    %v1045 = vmax.f32 %v1027, 1e-30
    %v1046 = vmax.f32 %v1030, 1e-30
    %v1047 = vmax.f32 %v1033, 1e-30
    %v1048 = vmax.f32 %v1036, 1e-30
    %v1049 = vmax.f32 %v1039, 1e-30
    %v1050 = vmax.f32 %v1042, 1e-30
    %v1051 = vrcp.pop %v1043
    %v1052 = vmul.f32 %v1043, %v1051
    %v1053 = vsub.f32 1.0, %v1052
    %v1054 = vmul.f32 %v1051, %v1053
    %v1055 = vadd.f32 %v1051, %v1054
    %vm1056 = vweird.f32 %v1043
    %vm1057 = vweird.f32 %v1051
    %vm1058 = vmor %vm1056, %vm1057
    %v1059 = vsel %vm1058, %v1051, %v1055
    %v1060 = vand.u32 2147483647, %v1043
    %vm1061 = vcmp.eq.f32.partialorder %v1060, 8.507059e+37
    %v1062 = vand.u32 %v1043, 2147483648
    %v1063 = vor.u32 1.1754944e-38, %v1062
    %v1064 = vsel %vm1061, %v1063, %v1059
    %v1065 = vmul.f32 %v1011, %v1064
    %v1066 = vrcp.pop %v1044
    %v1067 = vmul.f32 %v1044, %v1066
    %v1068 = vsub.f32 1.0, %v1067
    %v1069 = vmul.f32 %v1066, %v1068
    %v1070 = vadd.f32 %v1066, %v1069
    %vm1071 = vweird.f32 %v1044
    %vm1072 = vweird.f32 %v1066
    %vm1073 = vmor %vm1071, %vm1072
    %v1074 = vsel %vm1073, %v1066, %v1070
    %v1075 = vand.u32 2147483647, %v1044
    %vm1076 = vcmp.eq.f32.partialorder %v1075, 8.507059e+37
    %v1077 = vand.u32 %v1044, 2147483648
    %v1078 = vor.u32 1.1754944e-38, %v1077
    %v1079 = vsel %vm1076, %v1078, %v1074
    %v1080 = vmul.f32 %v1012, %v1079
    %v1081 = vrcp.pop %v1045
    %v1082 = vmul.f32 %v1045, %v1081
    %v1083 = vsub.f32 1.0, %v1082
    %v1084 = vmul.f32 %v1081, %v1083
    %v1085 = vadd.f32 %v1081, %v1084
    %vm1086 = vweird.f32 %v1045
    %vm1087 = vweird.f32 %v1081
    %vm1088 = vmor %vm1086, %vm1087
    %v1089 = vsel %vm1088, %v1081, %v1085
    %v1090 = vand.u32 2147483647, %v1045
    %vm1091 = vcmp.eq.f32.partialorder %v1090, 8.507059e+37
    %v1092 = vand.u32 %v1045, 2147483648
    %v1093 = vor.u32 1.1754944e-38, %v1092
    %v1094 = vsel %vm1091, %v1093, %v1089
    %v1095 = vmul.f32 %v1013, %v1094
    %v1096 = vrcp.pop %v1046
    %v1097 = vmul.f32 %v1046, %v1096
    %v1098 = vsub.f32 1.0, %v1097
    %v1099 = vmul.f32 %v1096, %v1098
    %v1100 = vadd.f32 %v1096, %v1099
    %vm1101 = vweird.f32 %v1046
    %vm1102 = vweird.f32 %v1096
    %vm1103 = vmor %vm1101, %vm1102
    %v1104 = vsel %vm1103, %v1096, %v1100
    %v1105 = vand.u32 2147483647, %v1046
    %vm1106 = vcmp.eq.f32.partialorder %v1105, 8.507059e+37
    %v1107 = vand.u32 %v1046, 2147483648
    %v1108 = vor.u32 1.1754944e-38, %v1107
    %v1109 = vsel %vm1106, %v1108, %v1104
    %v1110 = vmul.f32 %v1014, %v1109
    %v1111 = vrcp.pop %v1047
    %v1112 = vmul.f32 %v1047, %v1111
    %v1113 = vsub.f32 1.0, %v1112
    %v1114 = vmul.f32 %v1111, %v1113
    %v1115 = vadd.f32 %v1111, %v1114
    %vm1116 = vweird.f32 %v1047
    %vm1117 = vweird.f32 %v1111
    %vm1118 = vmor %vm1116, %vm1117
    %v1119 = vsel %vm1118, %v1111, %v1115
    %v1120 = vand.u32 2147483647, %v1047
    %vm1121 = vcmp.eq.f32.partialorder %v1120, 8.507059e+37
    %v1122 = vand.u32 %v1047, 2147483648
    %v1123 = vor.u32 1.1754944e-38, %v1122
    %v1124 = vsel %vm1121, %v1123, %v1119
    %v1125 = vmul.f32 %v1015, %v1124
    %v1126 = vrcp.pop %v1048
    %v1127 = vmul.f32 %v1048, %v1126
    %v1128 = vsub.f32 1.0, %v1127
    %v1129 = vmul.f32 %v1126, %v1128
    %v1130 = vadd.f32 %v1126, %v1129
    %vm1131 = vweird.f32 %v1048
    %vm1132 = vweird.f32 %v1126
    %vm1133 = vmor %vm1131, %vm1132
    %v1134 = vsel %vm1133, %v1126, %v1130
    %v1135 = vand.u32 2147483647, %v1048
    %vm1136 = vcmp.eq.f32.partialorder %v1135, 8.507059e+37
    %v1137 = vand.u32 %v1048, 2147483648
    %v1138 = vor.u32 1.1754944e-38, %v1137
    %v1139 = vsel %vm1136, %v1138, %v1134
    %v1140 = vmul.f32 %v1016, %v1139
    %v1141 = vrcp.pop %v1049
    %v1142 = vmul.f32 %v1049, %v1141
    %v1143 = vsub.f32 1.0, %v1142
    %v1144 = vmul.f32 %v1141, %v1143
    %v1145 = vadd.f32 %v1141, %v1144
    %vm1146 = vweird.f32 %v1049
    %vm1147 = vweird.f32 %v1141
    %vm1148 = vmor %vm1146, %vm1147
    %v1149 = vsel %vm1148, %v1141, %v1145
    %v1150 = vand.u32 2147483647, %v1049
    %vm1151 = vcmp.eq.f32.partialorder %v1150, 8.507059e+37
    %v1152 = vand.u32 %v1049, 2147483648
    %v1153 = vor.u32 1.1754944e-38, %v1152
    %v1154 = vsel %vm1151, %v1153, %v1149
    %v1155 = vmul.f32 %v1017, %v1154
    %v1156 = vrcp.pop %v1050
    %v1157 = vmul.f32 %v1050, %v1156
    %v1158 = vsub.f32 1.0, %v1157
    %v1159 = vmul.f32 %v1156, %v1158
    %v1160 = vadd.f32 %v1156, %v1159
    %vm1161 = vweird.f32 %v1050
    %vm1162 = vweird.f32 %v1156
    %vm1163 = vmor %vm1161, %vm1162
    %v1164 = vsel %vm1163, %v1156, %v1160
    %v1165 = vand.u32 2147483647, %v1050
    %vm1166 = vcmp.eq.f32.partialorder %v1165, 8.507059e+37
    %v1167 = vand.u32 %v1050, 2147483648
    %v1168 = vor.u32 1.1754944e-38, %v1167
    %v1169 = vsel %vm1166, %v1168, %v1164
    %v1170 = vmul.f32 %v1018, %v1169
    %1171 = vrot.lane.b32.xlu0 %v827, 64
    %v1172 = vpop.permute.xlu0 %1171
    %1173 = vrot.lane.b32.xlu0 %v830, 64
    %v1174 = vpop.permute.xlu0 %1173
    %1175 = vrot.lane.b32.xlu0 %v833, 64
    %v1176 = vpop.permute.xlu0 %1175
    %1177 = vrot.lane.b32.xlu0 %v836, 64
    %v1178 = vpop.permute.xlu0 %1177
    %1179 = vrot.lane.b32.xlu0 %v839, 64
    %v1180 = vpop.permute.xlu0 %1179
    %1181 = vrot.lane.b32.xlu0 %v842, 64
    %v1182 = vpop.permute.xlu0 %1181
    %1183 = vrot.lane.b32.xlu0 %v845, 64
    %v1184 = vpop.permute.xlu0 %1183
    %1185 = vrot.lane.b32.xlu0 %v848, 64
    %v1186 = vpop.permute.xlu0 %1185
    %v1196 = vsel %vm324, %v1065, 0
    %v1199 = vsel %vm324, %v1080, 0
    %v1202 = vsel %vm324, %v1095, 0
    %v1205 = vsel %vm324, %v1110, 0
    %v1208 = vsel %vm324, %v1125, 0
    %v1211 = vsel %vm324, %v1140, 0
    %v1214 = vsel %vm324, %v1155, 0
    %v1217 = vsel %vm324, %v1170, 0
    %1219 = vmatpush.msra.mxu0 0.0
    %1220 = vmatpush.msra.mxu0 0.0
    %1221 = vmatpush.msra.mxu0 0.0
    %1222 = vmatpush.msra.mxu0 0.0
    %1223 = vmatpush.msra.mxu0 0.0
    %1224 = vmatpush.msra.mxu0 0.0
    %1225 = vmatpush.msra.mxu0 0.0
    %1226 = vmatpush.msra.mxu0 0.0
    %1227 = vmatpush.msra.mxu0 %v1186
    %1228 = vmatpush.msra.mxu0 %v1184
    %1229 = vmatpush.msra.mxu0 %v1182
    %1230 = vmatpush.msra.mxu0 %v1180
    %1231 = vmatpush.msra.mxu0 %v1178
    %1232 = vmatpush.msra.mxu0 %v1176
    %1233 = vmatpush.msra.mxu0 %v1174
    %1234 = vmatpush.msra.mxu0 %v1172
    %1235 = vmatmul.f32.gmra.mxu0 %v1196
    %v1236 = vpop.f32.mrf.mxu0
    %v1237 = vadd.f32 0.0, %v1236
    %1238 = vmatmul.f32.gmra.mxu0 %v1199
    %v1239 = vpop.f32.mrf.mxu0
    %v1240 = vadd.f32 0.0, %v1239
    %1241 = vmatmul.f32.gmra.mxu0 %v1202
    %v1242 = vpop.f32.mrf.mxu0
    %v1243 = vadd.f32 0.0, %v1242
    %1244 = vmatmul.f32.gmra.mxu0 %v1205
    %v1245 = vpop.f32.mrf.mxu0
    %v1246 = vadd.f32 0.0, %v1245
    %1247 = vmatmul.f32.gmra.mxu0 %v1208
    %v1248 = vpop.f32.mrf.mxu0
    %v1249 = vadd.f32 0.0, %v1248
    %1250 = vmatmul.f32.gmra.mxu0 %v1211
    %v1251 = vpop.f32.mrf.mxu0
    %v1252 = vadd.f32 0.0, %v1251
    %1253 = vmatmul.f32.gmra.mxu0 %v1214
    %v1254 = vpop.f32.mrf.mxu0
    %v1255 = vadd.f32 0.0, %v1254
    %1256 = vmatmul.f32.gmra.mxu0 %v1217
    %v1257 = vpop.f32.mrf.mxu0
    %v1258 = vadd.f32 0.0, %v1257
    %1259 = vdwg.mxu0
    %v1260 = vmul.f32 %v1237, %v147
    %v1261 = vmul.f32 %v1240, %v148
    %v1262 = vmul.f32 %v1243, %v149
    %v1263 = vmul.f32 %v1246, %v150
    %v1264 = vmul.f32 %v1249, %v151
    %v1265 = vmul.f32 %v1252, %v152
    %v1266 = vmul.f32 %v1255, %v153
    %v1267 = vmul.f32 %v1258, %v154
    %v1268 = vadd.f32 %v1260, %v1262
    %v1269 = vadd.f32 %v1261, %v1263
    %v1270 = vadd.f32 %v1268, %v1264
    %v1271 = vadd.f32 %v1269, %v1265
    %v1272 = vadd.f32 %v1270, %v1266
    %v1273 = vadd.f32 %v1271, %v1267
    %s1274 = scalar_lea.vmem %s8, 1
    %v1275 = vld [vmem:[%s1274] sm:$0x1]
    %v1277 = vperm.slane %v1275, 0
    %v1279 = vmul.f32 %v1272, %v1277
    %v1280 = vmul.f32 %v1273, %v1277
    %s1281 = scalar_lea.vmem %s9, 1
    %v1282 = vld [vmem:[%s1281] sm:$0x1]
    %v1284 = vperm.slane %v1282, 0
    %1285 = vrot.lane.b32.xlu0 %v1284, 96
    %v1286 = vpop.permute.xlu0 %1285
    %v1288 = vmul.f32 %v827, %v1286
    %v1289 = vmul.f32 %v830, %v1286
    %1292 = vrot.lane.b32.xlu0 %v1288, 32
    %v1293 = vpop.permute.xlu0 %1292
    %1294 = vrot.lane.b32.xlu0 %v1289, 32
    %v1295 = vpop.permute.xlu0 %1294
    %v1298 = vadd.f32 %v1279, %v1293
    %v1299 = vadd.f32 %v1280, %v1295
    %v1300 = vsel %vm163, %v1298, 0.0
    %1301 = vadd.xlane.f32.xlu0 %v1300
    %v1302 = vpop.xlane.xlu0 %1301
    %v1303 = vsel %vm163, %v1299, 0.0
    %1304 = vadd.xlane.f32.xlu0 %v1303
    %v1305 = vpop.xlane.xlu0 %1304
    %v1306 = vxor.u32 %v1302, 2147483648
    %v1307 = vxor.u32 %v1305, 2147483648
    %v1308 = vmul.f32 %v1306, 1.442695
    %v1309 = vpow.pop %v1308
    %v1310 = vmul.f32 %v1307, 1.442695
    %v1311 = vpow.pop %v1310
    %v1312 = vadd.f32 %v1309, 1.0
    %v1313 = vadd.f32 %v1311, 1.0
    %v1314 = vrcp.pop %v1312
    %v1315 = vmul.f32 %v1312, %v1314
    %v1316 = vsub.f32 1.0, %v1315
    %v1317 = vmul.f32 %v1314, %v1316
    %v1318 = vadd.f32 %v1314, %v1317
    %vm1319 = vweird.f32 %v1312
    %vm1320 = vweird.f32 %v1314
    %vm1321 = vmor %vm1319, %vm1320
    %v1322 = vsel %vm1321, %v1314, %v1318
    %v1323 = vand.u32 2147483647, %v1312
    %vm1324 = vcmp.eq.f32.partialorder %v1323, 8.507059e+37
    %v1325 = vand.u32 %v1312, 2147483648
    %v1326 = vor.u32 1.1754944e-38, %v1325
    %v1327 = vsel %vm1324, %v1326, %v1322
    %v1328 = vmul.f32 1.0, %v1327
    %v1329 = vrcp.pop %v1313
    %v1330 = vmul.f32 %v1313, %v1329
    %v1331 = vsub.f32 1.0, %v1330
    %v1332 = vmul.f32 %v1329, %v1331
    %v1333 = vadd.f32 %v1329, %v1332
    %vm1334 = vweird.f32 %v1313
    %vm1335 = vweird.f32 %v1329
    %vm1336 = vmor %vm1334, %vm1335
    %v1337 = vsel %vm1336, %v1329, %v1333
    %v1338 = vand.u32 2147483647, %v1313
    %vm1339 = vcmp.eq.f32.partialorder %v1338, 8.507059e+37
    %v1340 = vand.u32 %v1313, 2147483648
    %v1341 = vor.u32 1.1754944e-38, %v1340
    %v1342 = vsel %vm1339, %v1341, %v1337
    %v1343 = vmul.f32 1.0, %v1342
    %v1344 = vmul.f32 %v1328, %v827
    %v1345 = vmul.f32 %v1343, %v830
    %v1346 = vsub.f32 1.0, %v1328
    %v1347 = vsub.f32 1.0, %v1343
    %v1348 = vmul.f32 %v1346, %v1272
    %v1349 = vmul.f32 %v1347, %v1273
    %1352 = vrot.lane.b32.xlu0 %v1348, 96
    %v1353 = vpop.permute.xlu0 %1352
    %1354 = vrot.lane.b32.xlu0 %v1349, 96
    %v1355 = vpop.permute.xlu0 %1354
    %v1358 = vadd.f32 %v1344, %v1353
    %v1359 = vadd.f32 %v1345, %v1355
    %1362 = vrot.lane.b32.xlu0 %v1358, 32
    %v1363 = vpop.permute.xlu0 %1362
    %1364 = vrot.lane.b32.xlu0 %v1359, 32
    %v1365 = vpop.permute.xlu0 %1364
    %v1368 = vadd.f32 %v791, %v1363
    %v1369 = vadd.f32 %v792, %v1365
    %v1370 = vsel %vm163, %v1368, 0.0
    %1371 = vadd.xlane.f32.xlu0 %v1370
    %v1372 = vpop.xlane.xlu0 %1371
    %v1373 = vsel %vm163, %v1369, 0.0
    %1374 = vadd.xlane.f32.xlu0 %v1373
    %v1375 = vpop.xlane.xlu0 %1374
    %v1376 = vmul.f32 %v1372, %v742
    %v1377 = vmul.f32 %v1375, %v742
    %v1378 = vsub.f32 %v1368, %v1376
    %v1379 = vsub.f32 %v1369, %v1377
    %v1380 = vmul.f32 %v1378, %v1378
    %v1381 = vmul.f32 %v1379, %v1379
    %v1382 = vsel %vm163, %v1380, 0.0
    %1383 = vadd.xlane.f32.xlu0 %v1382
    %v1384 = vpop.xlane.xlu0 %1383
    %v1385 = vsel %vm163, %v1381, 0.0
    %1386 = vadd.xlane.f32.xlu0 %v1385
    %v1387 = vpop.xlane.xlu0 %1386
    %v1388 = vmul.f32 %v1384, %v742
    %v1389 = vmul.f32 %v1387, %v742
    %v1390 = vadd.f32 %v1388, 1e-05
    %v1391 = vadd.f32 %v1389, 1e-05
    %v1392 = vrsqrt.pop %v1390
    %v1393 = vmul.f32 %v1392, %v1390
    %v1394 = vmul.f32 %v1393, %v1392
    %v1395 = vmul.f32 0.5, %v1394
    %v1396 = vsub.f32 1.5, %v1395
    %v1397 = vmul.f32 %v1392, %v1396
    %vm1398 = vweird.f32 %v1390
    %vm1399 = vweird.f32 %v1392
    %vm1400 = vmor %vm1398, %vm1399
    %v1401 = vsel %vm1400, %v1392, %v1397
    %v1402 = vrsqrt.pop %v1391
    %v1403 = vmul.f32 %v1402, %v1391
    %v1404 = vmul.f32 %v1403, %v1402
    %v1405 = vmul.f32 0.5, %v1404
    %v1406 = vsub.f32 1.5, %v1405
    %v1407 = vmul.f32 %v1402, %v1406
    %vm1408 = vweird.f32 %v1391
    %vm1409 = vweird.f32 %v1402
    %vm1410 = vmor %vm1408, %vm1409
    %v1411 = vsel %vm1410, %v1402, %v1407
    %v1412 = vmul.f32 %v1378, %v1401
    %v1413 = vmul.f32 %v1379, %v1411
    %s1414 = scalar_lea.vmem %s10, 1
    %v1415 = vld [vmem:[%s1414] sm:$0x1]
    %v1417 = vperm.slane %v1415, 0
    %v1419 = vmul.f32 %v1412, %v1417
    %v1420 = vmul.f32 %v1413, %v1417
    %s1421 = scalar_lea.vmem %s11, 1
    %v1422 = vld [vmem:[%s1421] sm:$0x1]
    %v1424 = vperm.slane %v1422, 0
    %v1426 = vadd.f32 %v1419, %v1424
    %v1427 = vadd.f32 %v1420, %v1424
    %v1428 = vld [vmem:[%s12] sm:$0x3]
    %v1430 = vsel %vm101, %v1428, 0
    %1432 = vmatpush.msra.mxu0 0.0
    %1433 = vmatpush.msra.mxu0 0.0
    %1434 = vmatpush.msra.mxu0 0.0
    %1435 = vmatpush.msra.mxu0 0.0
    %1436 = vmatpush.msra.mxu0 0.0
    %1437 = vmatpush.msra.mxu0 0.0
    %1438 = vmatpush.msra.mxu0 0.0
    %1439 = vmatpush.msra.mxu0 0.0
    %1440 = vmatpush.msra.mxu0 0.0
    %1441 = vmatpush.msra.mxu0 0.0
    %1442 = vmatpush.msra.mxu0 0.0
    %1443 = vmatpush.msra.mxu0 0.0
    %1444 = vmatpush.msra.mxu0 0.0
    %1445 = vmatpush.msra.mxu0 0.0
    %1446 = vmatpush.msra.mxu0 %v1427
    %1447 = vmatpush.msra.mxu0 %v1426
    %1448 = vmatmul.f32.gmra.mxu0 %v1430
    %v1449 = vpop.f32.mrf.mxu0
    %v1450 = vadd.f32 0.0, %v1449
    %1451 = vdwg.mxu0
    %v1452 = vld [vmem:[%s13] sm:$0x3]
    %1454 = vset.pattern.permute.xlu0 0
    %1455 = vperm.xlu0 %1454, %v1452
    %v1456 = vpop.permute.xlu0 %1455
    %v1458 = vmul.f32 %v1450, %v1456
    %v1459 = vld [vmem:[%s14] sm:$0xff]
    %v1460 = vld [vmem:[%s14 + $0x8] sm:$0xff]
    %v1461 = vld [vmem:[%s14 + $0x10] sm:$0xff]
    %v1462 = vld [vmem:[%s14 + $0x18] sm:$0xff]
    %v1463 = vld [vmem:[%s15] sm:$0x1]
    %v1465 = vperm.slane %v1463, 0
    %v1468 = vsel %vm163, %v1458, 0
    %1470 = vmatpush.msra.mxu0 0.0
    %1471 = vmatpush.msra.mxu0 0.0
    %1472 = vmatpush.msra.mxu0 0.0
    %1473 = vmatpush.msra.mxu0 0.0
    %1474 = vmatpush.msra.mxu0 0.0
    %1475 = vmatpush.msra.mxu0 0.0
    %1476 = vmatpush.msra.mxu0 0.0
    %1477 = vmatpush.msra.mxu0 0.0
    %1478 = vmatpush.msra.mxu0 0.0
    %1479 = vmatpush.msra.mxu0 0.0
    %1480 = vmatpush.msra.mxu0 0.0
    %1481 = vmatpush.msra.mxu0 0.0
    %1482 = vmatpush.msra.mxu0 %v1462
    %1483 = vmatpush.msra.mxu0 %v1461
    %1484 = vmatpush.msra.mxu0 %v1460
    %1485 = vmatpush.msra.mxu0 %v1459
    %1486 = vmatmul.f32.gmra.mxu0 %v1468
    %v1487 = vpop.f32.mrf.mxu0
    %v1488 = vadd.f32 %v1465, %v1487
    %1489 = vdwg.mxu0
    %v1490 = vmax.f32 %v1488, 0.0
    %v1491 = vld [vmem:[%s16] sm:$0xff]
    %v1492 = vld [vmem:[%s16 + $0x8] sm:$0xff]
    %v1493 = vld [vmem:[#allocation2] sm:$0x1]
    %v1495 = vperm.slane %v1493, 0
    %v1498 = vsel %vm101, %v1490, 0
    %1500 = vmatpush.msra.mxu0 0.0
    %1501 = vmatpush.msra.mxu0 0.0
    %1502 = vmatpush.msra.mxu0 0.0
    %1503 = vmatpush.msra.mxu0 0.0
    %1504 = vmatpush.msra.mxu0 0.0
    %1505 = vmatpush.msra.mxu0 0.0
    %1506 = vmatpush.msra.mxu0 0.0
    %1507 = vmatpush.msra.mxu0 0.0
    %1508 = vmatpush.msra.mxu0 0.0
    %1509 = vmatpush.msra.mxu0 0.0
    %1510 = vmatpush.msra.mxu0 0.0
    %1511 = vmatpush.msra.mxu0 0.0
    %1512 = vmatpush.msra.mxu0 0.0
    %1513 = vmatpush.msra.mxu0 0.0
    %1514 = vmatpush.msra.mxu0 %v1492
    %1515 = vmatpush.msra.mxu0 %v1491
    %1516 = vmatmul.f32.gmra.mxu0 %v1498
    %v1517 = vpop.f32.mrf.mxu0
    %v1518 = vadd.f32 %v1495, %v1517
    %1519 = vdwg.mxu0
    %vm1520 = vcmask 1024
    %1521 = vst.msk [vmem:[%s18] sm:$0x3] %vm1520, %v1518
    // Predicated region
    $region82: #{graph_transformer_forward.1} parent=1 // pred_check
      _
    $region83: #{graph_transformer_forward.1} parent=1 // pred_check_branch
      %1523 = sbr.rel (0) target = $region85
    $region84: #{graph_transformer_forward.1} parent=1 // pred_region
      _
    $region85: #{graph_transformer_forward.1} parent=1 // pred_fallthru
      _
    // Predicated region
    $region86: #{graph_transformer_forward.1} parent=1 // pred_check
      _
    $region87: #{graph_transformer_forward.1} parent=1 // pred_check_branch
      %1525 = sbr.rel (0) target = $region89
    $region88: #{graph_transformer_forward.1} parent=1 // pred_region
      _
    $region89: #{graph_transformer_forward.1} parent=1 // pred_fallthru
      _
    %1526 = vsyncpa [#allocation4], 1
    %1527 = vsyncpa [#allocation6], 1

</llo_original>
